<compile_context>
chip_gen: v7x
topology: tpu7x:2x2x1
jax: 0.10.0
libtpu: 0.0.40
codegen_flags: <defaults>
</compile_context>

<pallas_src>
import jax
import jax.numpy as jnp
from jax import lax
from jax.experimental import pallas as pl
from jax.experimental.pallas import tpu as pltpu
import numpy as np

NUM_LAYERS = 2        # original: 100
BATCH = 2             # original: 32
SEQ_LEN = 8
EMBED_DIM = 64        # original: 4800
HIDDEN_DIM = 32       # original: 256
LABEL_SIZE = 5
DROPOUT = 0           # dropout=0 in the reference -> no-op

T_CHUNK = 4           # time chunk per grid step (at real T, size so that
                      # 2 dirs x 2 bufs x (T_CHUNK,B,4H) bf16 + outputs + W_hh
                      # stays well under v7x's 64 MiB physical VMEM)
VMEM_LIMIT_BYTES = 48 * 1024 * 1024   # > v5e/v6e scoped defaults, < v7x physical


# ----------------------------------------------------------------------------
# In-kernel LSTM cell (PyTorch gate order: i, f, g, o), f32 math.
# At the real H=256 the gate slices are 128-lane aligned; at the toy H=32 the
# masked slices are negligible.
# ----------------------------------------------------------------------------
def _lstm_cell(gates, c_prev):
    H = gates.shape[-1] // 4
    i = jax.nn.sigmoid(gates[:, 0 * H:1 * H])
    f = jax.nn.sigmoid(gates[:, 1 * H:2 * H])
    g = jnp.tanh(gates[:, 2 * H:3 * H])
    o = jax.nn.sigmoid(gates[:, 3 * H:4 * H])
    c = f * c_prev + i * g
    h = o * jnp.tanh(c)
    return h, c


# ----------------------------------------------------------------------------
# Pallas kernel: one T_CHUNK slice of a bidirectional LSTM layer.
# Forward direction consumes chunk i in time order; backward direction
# consumes chunk nc-1-i in reverse time order (no flips anywhere).
# h/c state for both directions lives in f32 VMEM scratch across grid steps.
# ----------------------------------------------------------------------------
def _bilstm_layer_kernel(xgf_ref, xgb_ref, whhf_ref, whhb_ref,
                         outf_ref, outb_ref,
                         hf_ref, cf_ref, hb_ref, cb_ref):
    tc = xgf_ref.shape[0]

    @pl.when(pl.program_id(0) == 0)
    def _():
        z = jnp.zeros_like(hf_ref)
        hf_ref[...] = z
        cf_ref[...] = z
        hb_ref[...] = z
        cb_ref[...] = z

    # Loop-invariant weight loads hoisted out of the recurrence.
    whh_f = whhf_ref[...]            # (H, 4H), bf16
    whh_b = whhb_ref[...]

    def step(t, carry):
        h_f, c_f, h_b, c_b = carry
        rt = tc - 1 - t              # local reverse index within the chunk
        gates_f = xgf_ref[t].astype(jnp.float32) + jnp.dot(
            h_f.astype(whh_f.dtype), whh_f, preferred_element_type=jnp.float32)
        gates_b = xgb_ref[rt].astype(jnp.float32) + jnp.dot(
            h_b.astype(whh_b.dtype), whh_b, preferred_element_type=jnp.float32)
        h_f, c_f = _lstm_cell(gates_f, c_f)
        h_b, c_b = _lstm_cell(gates_b, c_b)
        outf_ref[t] = h_f.astype(outf_ref.dtype)    # original time order
        outb_ref[rt] = h_b.astype(outb_ref.dtype)   # original time order
        return h_f, c_f, h_b, c_b

    # TODO(synk): at real H=256, split W_hh into four (H,H) column blocks and
    # apply sigmoid/tanh per gate to keep the full (B,4H) gates out of vregs.
    carry = lax.fori_loop(
        0, tc, step,
        (hf_ref[...], cf_ref[...], hb_ref[...], cb_ref[...]),
        unroll=True)
    hf_ref[...], cf_ref[...], hb_ref[...], cb_ref[...] = carry


def bilstm_layer(xg, whh_f_t, whh_b_t, t_chunk):
    """xg: (T, B, 8H) fused fwd|bwd gate pre-activations."""
    T, B, G2 = xg.shape
    H = whh_f_t.shape[0]
    G = 4 * H
    assert G2 == 2 * G and T % t_chunk == 0
    nc = T // t_chunk
    act_dt = xg.dtype
    # TODO(synk): add pipeline_mode=pl.Buffered(3) on the gate specs if xprof
    # shows exposed input DMA on v5e.
    return pl.pallas_call(
        _bilstm_layer_kernel,
        out_shape=(jax.ShapeDtypeStruct((T, B, H), act_dt),
                   jax.ShapeDtypeStruct((T, B, H), act_dt)),
        grid=(nc,),
        in_specs=[
            pl.BlockSpec((t_chunk, B, G), lambda i: (i, 0, 0)),           # fwd half
            pl.BlockSpec((t_chunk, B, G), lambda i: (nc - 1 - i, 0, 1)),  # bwd half
            pl.BlockSpec((H, G), lambda i: (0, 0)),   # W_hh resident across chunks
            pl.BlockSpec((H, G), lambda i: (0, 0)),
        ],
        out_specs=(
            pl.BlockSpec((t_chunk, B, H), lambda i: (i, 0, 0)),
            pl.BlockSpec((t_chunk, B, H), lambda i: (nc - 1 - i, 0, 0)),
        ),
        scratch_shapes=[pltpu.VMEM((B, H), jnp.float32)] * 4,   # h_f c_f h_b c_b
        compiler_params=pltpu.CompilerParams(
            dimension_semantics=("arbitrary",),
            vmem_limit_bytes=VMEM_LIMIT_BYTES),
    )(xg, xg, whh_f_t, whh_b_t)


# ----------------------------------------------------------------------------
# Pallas kernel: LAST bidirectional layer fused with mean-pool + hidden2label.
# Same chunked recurrence; additionally accumulates sum_t h_f / h_b in VMEM
# scratch and emits only the (B, L) logits at the final grid step, so the
# last layer's (T, B, 2H) activations never touch HBM.
# ----------------------------------------------------------------------------
def _bilstm_head_kernel(xgf_ref, xgb_ref, whhf_ref, whhb_ref,
                        wlf_ref, wlb_ref, blab_ref, y_ref,
                        hf_ref, cf_ref, hb_ref, cb_ref, sf_ref, sb_ref):
    tc = xgf_ref.shape[0]

    @pl.when(pl.program_id(0) == 0)
    def _():
        z = jnp.zeros_like(hf_ref)
        hf_ref[...] = z
        cf_ref[...] = z
        hb_ref[...] = z
        cb_ref[...] = z
        sf_ref[...] = z
        sb_ref[...] = z

    whh_f = whhf_ref[...]
    whh_b = whhb_ref[...]

    def step(t, carry):
        h_f, c_f, h_b, c_b, s_f, s_b = carry
        rt = tc - 1 - t
        gates_f = xgf_ref[t].astype(jnp.float32) + jnp.dot(
            h_f.astype(whh_f.dtype), whh_f, preferred_element_type=jnp.float32)
        gates_b = xgb_ref[rt].astype(jnp.float32) + jnp.dot(
            h_b.astype(whh_b.dtype), whh_b, preferred_element_type=jnp.float32)
        h_f, c_f = _lstm_cell(gates_f, c_f)
        h_b, c_b = _lstm_cell(gates_b, c_b)
        return h_f, c_f, h_b, c_b, s_f + h_f, s_b + h_b

    carry = lax.fori_loop(
        0, tc, step,
        (hf_ref[...], cf_ref[...], hb_ref[...], cb_ref[...],
         sf_ref[...], sb_ref[...]),
        unroll=True)
    h_f, c_f, h_b, c_b, s_f, s_b = carry
    hf_ref[...], cf_ref[...], hb_ref[...], cb_ref[...] = h_f, c_f, h_b, c_b
    sf_ref[...], sb_ref[...] = s_f, s_b

    # TODO(synk): on v7x, run the two directions core-parallel on the two
    # TensorCores (pl.core_map / CORE_PARALLEL) with per-core h/c scratch and
    # combine the two pooled sums via VMEM_SHARED.
    @pl.when(pl.program_id(0) == pl.num_programs(0) - 1)
    def _():
        total_t = tc * pl.num_programs(0)
        mean_f = s_f / total_t
        mean_b = s_b / total_t
        # mean(concat([h_f, h_b], -1)) @ W_label^T == split-column matmuls.
        y = (jnp.dot(mean_f, wlf_ref[...], preferred_element_type=jnp.float32)
             + jnp.dot(mean_b, wlb_ref[...], preferred_element_type=jnp.float32)
             + blab_ref[...])
        y_ref[...] = y.astype(y_ref.dtype)


def bilstm_head(xg, whh_f_t, whh_b_t, w_label, b_label, t_chunk):
    T, B, G2 = xg.shape
    H = whh_f_t.shape[0]
    G = 4 * H
    L = w_label.shape[0]
    assert G2 == 2 * G and T % t_chunk == 0
    nc = T // t_chunk
    wl_f = jnp.transpose(w_label[:, :H]).astype(jnp.float32)   # (H, L)
    wl_b = jnp.transpose(w_label[:, H:]).astype(jnp.float32)   # (H, L)
    b2 = b_label.reshape(1, L).astype(jnp.float32)
    return pl.pallas_call(
        _bilstm_head_kernel,
        out_shape=jax.ShapeDtypeStruct((B, L), jnp.float32),
        grid=(nc,),
        in_specs=[
            pl.BlockSpec((t_chunk, B, G), lambda i: (i, 0, 0)),
            pl.BlockSpec((t_chunk, B, G), lambda i: (nc - 1 - i, 0, 1)),
            pl.BlockSpec((H, G), lambda i: (0, 0)),
            pl.BlockSpec((H, G), lambda i: (0, 0)),
            pl.BlockSpec((H, L), lambda i: (0, 0)),
            pl.BlockSpec((H, L), lambda i: (0, 0)),
            pl.BlockSpec((1, L), lambda i: (0, 0)),
        ],
        out_specs=pl.BlockSpec((B, L), lambda i: (0, 0)),
        scratch_shapes=[pltpu.VMEM((B, H), jnp.float32)] * 6,  # h,c x2 + s_f,s_b
        compiler_params=pltpu.CompilerParams(
            dimension_semantics=("arbitrary",),
            vmem_limit_bytes=VMEM_LIMIT_BYTES),
    )(xg, xg, whh_f_t, whh_b_t, wl_f, wl_b, b2)


# ----------------------------------------------------------------------------
# Hoisted, direction-fused input projection (XLA side, one big MXU GEMM):
#   xg = concat(pieces, -1) @ [W_ih_f; W_ih_b]^T + [bias_f; bias_b]
# `pieces` is a list of (T,B,Ik) chunks whose last-dim concat is the layer
# input, so W_ih is split by columns instead of materializing the concat.
# ----------------------------------------------------------------------------
def _fused_input_projection(pieces, w_ih_fb, bias_fb, act_dtype):
    out = None
    off = 0
    for p in pieces:
        k = p.shape[-1]
        w = w_ih_fb[:, off:off + k].astype(act_dtype)           # (8H, Ik)
        term = jnp.einsum('tbk,gk->tbg', p.astype(act_dtype), w,
                          preferred_element_type=jnp.float32)   # (T, B, 8H)
        out = term if out is None else out + term
        off += k
    return (out + bias_fb).astype(act_dtype)


# ----------------------------------------------------------------------------
# Full forward pass (matches BiLSTMSentiment.forward with zero initial hidden).
# ----------------------------------------------------------------------------
def bilstm_sentiment_forward(sentence, params, *, act_dtype=jnp.bfloat16,
                             t_chunk=T_CHUNK):
    batch = sentence.shape[0]
    seq_len = sentence.shape[1]
    # PyTorch's sentence.view(seq_len, batch, -1) is a raw reshape (shared
    # quirk with the reference; a transpose(1,0,2) would be the semantically
    # intended op for batch-major input).
    x = sentence.reshape(seq_len, batch, -1)
    pieces = [x]                              # layer input as un-concatenated chunks
    n_layers = len(params["lstm"])
    y = None
    for li, lp in enumerate(params["lstm"]):
        w_ih_fb = jnp.concatenate([lp["w_ih_f"], lp["w_ih_b"]], axis=0)   # (8H, In)
        bias_fb = jnp.concatenate([lp["b_ih_f"] + lp["b_hh_f"],
                                   lp["b_ih_b"] + lp["b_hh_b"]], axis=0)  # (8H,)
        xg = _fused_input_projection(pieces, w_ih_fb, bias_fb, act_dtype)
        whh_f_t = jnp.transpose(lp["w_hh_f"]).astype(act_dtype)   # (H, 4H)
        whh_b_t = jnp.transpose(lp["w_hh_b"]).astype(act_dtype)   # (H, 4H)
        if li < n_layers - 1:
            # TODO(synk): optionally fold the next layer's input projection into
            # this kernel's epilogue to save an HBM round trip per layer.
            out_f, out_b = bilstm_layer(xg, whh_f_t, whh_b_t, t_chunk)
            pieces = [out_f, out_b]           # no activation concat materialized
        else:
            y = bilstm_head(xg, whh_f_t, whh_b_t,
                            params["w_label"], params["b_label"], t_chunk)
    return y


# ----------------------------------------------------------------------------
# Deterministic parameter init (PyTorch-style uniform(-1/sqrt(H), 1/sqrt(H))).
# ----------------------------------------------------------------------------
def init_params(key):
    k = 1.0 / np.sqrt(HIDDEN_DIM)
    layers = []
    for layer in range(NUM_LAYERS):
        in_size = EMBED_DIM if layer == 0 else 2 * HIDDEN_DIM
        lp = {}
        for d in ("f", "b"):
            key, k1, k2, k3, k4 = jax.random.split(key, 5)
            lp[f"w_ih_{d}"] = jax.random.uniform(k1, (4 * HIDDEN_DIM, in_size),
                                                 jnp.float32, -k, k)
            lp[f"w_hh_{d}"] = jax.random.uniform(k2, (4 * HIDDEN_DIM, HIDDEN_DIM),
                                                 jnp.float32, -k, k)
            lp[f"b_ih_{d}"] = jax.random.uniform(k3, (4 * HIDDEN_DIM,),
                                                 jnp.float32, -k, k)
            lp[f"b_hh_{d}"] = jax.random.uniform(k4, (4 * HIDDEN_DIM,),
                                                 jnp.float32, -k, k)
        layers.append(lp)
    key, k1, k2 = jax.random.split(key, 3)
    kl = 1.0 / np.sqrt(2 * HIDDEN_DIM)
    return {
        "lstm": layers,
        "w_label": jax.random.uniform(k1, (LABEL_SIZE, 2 * HIDDEN_DIM),
                                      jnp.float32, -kl, kl),
        "b_label": jax.random.uniform(k2, (LABEL_SIZE,), jnp.float32, -kl, kl),
    }


# ----------------------------------------------------------------------------
# Pure-JAX f32 reference (lax.scan) for correctness check.
# ----------------------------------------------------------------------------
def _ref_lstm_dir(x, w_ih, w_hh, b_ih, b_hh):
    T, B, _ = x.shape
    H = w_hh.shape[1]

    def step(carry, x_t):
        h, c = carry
        gates = x_t @ w_ih.T + h @ w_hh.T + b_ih + b_hh
        i, f, g, o = jnp.split(gates, 4, axis=-1)
        i, f, o = jax.nn.sigmoid(i), jax.nn.sigmoid(f), jax.nn.sigmoid(o)
        g = jnp.tanh(g)
        c = f * c + i * g
        h = o * jnp.tanh(c)
        return (h, c), h

    init = (jnp.zeros((B, H), jnp.float32), jnp.zeros((B, H), jnp.float32))
    _, hs = jax.lax.scan(step, init, x)
    return hs


def _ref_forward(sentence, params):
    seq_len = sentence.shape[1]
    x = sentence.reshape(seq_len, BATCH, -1)
    layer_in = x
    for lp in params["lstm"]:
        out_f = _ref_lstm_dir(layer_in, lp["w_ih_f"], lp["w_hh_f"],
                              lp["b_ih_f"], lp["b_hh_f"])
        out_b = jnp.flip(_ref_lstm_dir(jnp.flip(layer_in, 0), lp["w_ih_b"],
                                       lp["w_hh_b"], lp["b_ih_b"], lp["b_hh_b"]), 0)
        layer_in = jnp.concatenate([out_f, out_b], axis=-1)
    mean = jnp.mean(layer_in, axis=0)
    return mean @ params["w_label"].T + params["b_label"]


if __name__ == "__main__":
    key = jax.random.PRNGKey(0)
    key, pkey, xkey = jax.random.split(key, 3)
    params = init_params(pkey)
    # sentence: (batch, seq_len, embedding_dim)
    sentence = jax.random.normal(xkey, (BATCH, SEQ_LEN, EMBED_DIM), jnp.float32)

    # Production path: bf16 storage, f32 cell math / accumulation.
    y_bf16 = jax.block_until_ready(
        bilstm_sentiment_forward(sentence, params, act_dtype=jnp.bfloat16))
    assert y_bf16.shape == (BATCH, LABEL_SIZE)

    # f32 path for exact structural parity with the pure-JAX reference.
    y_f32 = jax.block_until_ready(
        bilstm_sentiment_forward(sentence, params, act_dtype=jnp.float32))
    y_ref = jax.block_until_ready(_ref_forward(sentence, params))

    np.testing.assert_allclose(np.asarray(y_f32), np.asarray(y_ref),
                               rtol=1e-4, atol=1e-4)
    np.testing.assert_allclose(np.asarray(y_bf16, dtype=np.float32),
                               np.asarray(y_ref),
                               rtol=1e-1, atol=1e-1)   # bf16 storage tolerance
    print("KERNEL_OK")
</pallas_src>

<mosaic_0001>
module attributes {stable_mosaic.version = 11 : i64} {
  func.func @_bilstm_layer_kernel(%arg0: i32, %arg1: memref<4x2x128xbf16, #tpu.memory_space<vmem>>, %arg2: memref<4x2x128xbf16, #tpu.memory_space<vmem>>, %arg3: memref<32x128xbf16, #tpu.memory_space<vmem>>, %arg4: memref<32x128xbf16, #tpu.memory_space<vmem>>, %arg5: memref<4x2x32xbf16, #tpu.memory_space<vmem>>, %arg6: memref<4x2x32xbf16, #tpu.memory_space<vmem>>, %arg7: memref<2x32xf32, #tpu.memory_space<vmem>>, %arg8: memref<2x32xf32, #tpu.memory_space<vmem>>, %arg9: memref<2x32xf32, #tpu.memory_space<vmem>>, %arg10: memref<2x32xf32, #tpu.memory_space<vmem>>) attributes {dimension_semantics = [#tpu.dimension_semantics<arbitrary>], iteration_bounds = array<i64: 2>, scalar_prefetch = 0 : i64, scratch_operands = 4 : i64, tpu.core_type = #tpu.core_type<tc>, window_params = [{transform_indices = @transform_0, window_bounds = array<i64: 4, 2, 128>}, {transform_indices = @transform_1, window_bounds = array<i64: 4, 2, 128>}, {pipeline_mode = #tpu.pipeline_mode<synchronous>, transform_indices = @transform_2, window_bounds = array<i64: 32, 128>}, {pipeline_mode = #tpu.pipeline_mode<synchronous>, transform_indices = @transform_3, window_bounds = array<i64: 32, 128>}, {transform_indices = @transform_4, window_bounds = array<i64: 4, 2, 32>}, {transform_indices = @transform_5, window_bounds = array<i64: 4, 2, 32>}]} {
    %c0_i32 = arith.constant 0 : i32
    %0 = arith.cmpi eq, %arg0, %c0_i32 : i32
    %1 = arith.extui %0 : i1 to i32
    %c0_i32_0 = arith.constant 0 : i32
    %2 = arith.cmpi ne, %1, %c0_i32_0 : i32
    scf.if %2 {
      %cst_88 = arith.constant 0.000000e+00 : f32
      %313 = vector.broadcast %cst_88 : f32 to vector<2x32xf32>
      %c0_89 = arith.constant 0 : index
      %c0_90 = arith.constant 0 : index
      %314 = vector.load %arg7[%c0_89, %c0_90] : memref<2x32xf32, #tpu.memory_space<vmem>>, vector<2x32xf32>
      tpu.vector_store %arg7[%c0_89, %c0_90], %313 {strides = array<i32>} : memref<2x32xf32, #tpu.memory_space<vmem>>, vector<2x32xf32>,
      %c0_91 = arith.constant 0 : index
      %c0_92 = arith.constant 0 : index
      %315 = vector.load %arg8[%c0_91, %c0_92] : memref<2x32xf32, #tpu.memory_space<vmem>>, vector<2x32xf32>
      tpu.vector_store %arg8[%c0_91, %c0_92], %313 {strides = array<i32>} : memref<2x32xf32, #tpu.memory_space<vmem>>, vector<2x32xf32>,
      %c0_93 = arith.constant 0 : index
      %c0_94 = arith.constant 0 : index
      %316 = vector.load %arg9[%c0_93, %c0_94] : memref<2x32xf32, #tpu.memory_space<vmem>>, vector<2x32xf32>
      tpu.vector_store %arg9[%c0_93, %c0_94], %313 {strides = array<i32>} : memref<2x32xf32, #tpu.memory_space<vmem>>, vector<2x32xf32>,
      %c0_95 = arith.constant 0 : index
      %c0_96 = arith.constant 0 : index
      %317 = vector.load %arg10[%c0_95, %c0_96] : memref<2x32xf32, #tpu.memory_space<vmem>>, vector<2x32xf32>
      tpu.vector_store %arg10[%c0_95, %c0_96], %313 {strides = array<i32>} : memref<2x32xf32, #tpu.memory_space<vmem>>, vector<2x32xf32>,
    } else {
    }
    %c0 = arith.constant 0 : index
    %c0_1 = arith.constant 0 : index
    %3 = vector.load %arg3[%c0, %c0_1] : memref<32x128xbf16, #tpu.memory_space<vmem>>, vector<32x128xbf16>
    %c0_2 = arith.constant 0 : index
    %c0_3 = arith.constant 0 : index
    %4 = vector.load %arg4[%c0_2, %c0_3] : memref<32x128xbf16, #tpu.memory_space<vmem>>, vector<32x128xbf16>
    %c0_4 = arith.constant 0 : index
    %c0_5 = arith.constant 0 : index
    %5 = vector.load %arg7[%c0_4, %c0_5] : memref<2x32xf32, #tpu.memory_space<vmem>>, vector<2x32xf32>
    %c0_6 = arith.constant 0 : index
    %c0_7 = arith.constant 0 : index
    %6 = vector.load %arg8[%c0_6, %c0_7] : memref<2x32xf32, #tpu.memory_space<vmem>>, vector<2x32xf32>
    %c0_8 = arith.constant 0 : index
    %c0_9 = arith.constant 0 : index
    %7 = vector.load %arg9[%c0_8, %c0_9] : memref<2x32xf32, #tpu.memory_space<vmem>>, vector<2x32xf32>
    %c0_10 = arith.constant 0 : index
    %c0_11 = arith.constant 0 : index
    %8 = vector.load %arg10[%c0_10, %c0_11] : memref<2x32xf32, #tpu.memory_space<vmem>>, vector<2x32xf32>
    %c0_i32_12 = arith.constant 0 : i32
    %c3_i32 = arith.constant 3 : i32
    %9 = arith.subi %c3_i32, %c0_i32_12 : i32
    %10 = arith.index_cast %c0_i32_12 : i32 to index
    %c0_13 = arith.constant 0 : index
    %c0_14 = arith.constant 0 : index
    %11 = vector.load %arg1[%10, %c0_13, %c0_14] : memref<4x2x128xbf16, #tpu.memory_space<vmem>>, vector<1x2x128xbf16>
    %12 = vector.shape_cast %11 : vector<1x2x128xbf16> to vector<2x128xbf16>
    %13 = arith.extf %12 : vector<2x128xbf16> to vector<2x128xf32>
    %14 = arith.truncf %5 : vector<2x32xf32> to vector<2x32xbf16>
    %cst = arith.constant dense<0.000000e+00> : vector<2x128xf32>
    %15 = tpu.matmul %14, %3, %cst {dimension_numbers = #tpu.dot_dimension_numbers<[1], [0], [0], [1], [0, 0, 1, 1], [], []>} : vector<2x32xbf16>, vector<32x128xbf16>, vector<2x128xf32> -> vector<2x128xf32>
    %16 = arith.addf %13, %15 : vector<2x128xf32>
    %17 = arith.index_cast %9 : i32 to index
    %c0_15 = arith.constant 0 : index
    %c0_16 = arith.constant 0 : index
    %18 = vector.load %arg2[%17, %c0_15, %c0_16] : memref<4x2x128xbf16, #tpu.memory_space<vmem>>, vector<1x2x128xbf16>
    %19 = vector.shape_cast %18 : vector<1x2x128xbf16> to vector<2x128xbf16>
    %20 = arith.extf %19 : vector<2x128xbf16> to vector<2x128xf32>
    %21 = arith.truncf %7 : vector<2x32xf32> to vector<2x32xbf16>
    %cst_17 = arith.constant dense<0.000000e+00> : vector<2x128xf32>
    %22 = tpu.matmul %21, %4, %cst_17 {dimension_numbers = #tpu.dot_dimension_numbers<[1], [0], [0], [1], [0, 0, 1, 1], [], []>} : vector<2x32xbf16>, vector<32x128xbf16>, vector<2x128xf32> -> vector<2x128xf32>
    %23 = arith.addf %20, %22 : vector<2x128xf32>
    %24 = vector.extract_strided_slice %16 {offsets = [0, 0], sizes = [2, 32], strides = [1, 1]} : vector<2x128xf32> to vector<2x32xf32>
    %25 = arith.negf %24 : vector<2x32xf32>
    %26 = math.exp %25 : vector<2x32xf32>
    %cst_18 = arith.constant 1.000000e+00 : f32
    %27 = vector.broadcast %cst_18 : f32 to vector<2x32xf32>
    %28 = arith.addf %27, %26 : vector<2x32xf32>
    %29 = arith.divf %27, %28 : vector<2x32xf32>
    %30 = vector.extract_strided_slice %16 {offsets = [0, 32], sizes = [2, 32], strides = [1, 1]} : vector<2x128xf32> to vector<2x32xf32>
    %31 = arith.negf %30 : vector<2x32xf32>
    %32 = math.exp %31 : vector<2x32xf32>
    %cst_19 = arith.constant 1.000000e+00 : f32
    %33 = vector.broadcast %cst_19 : f32 to vector<2x32xf32>
    %34 = arith.addf %33, %32 : vector<2x32xf32>
    %35 = arith.divf %33, %34 : vector<2x32xf32>
    %36 = vector.extract_strided_slice %16 {offsets = [0, 64], sizes = [2, 32], strides = [1, 1]} : vector<2x128xf32> to vector<2x32xf32>
    %37 = math.tanh %36 : vector<2x32xf32>
    %38 = vector.extract_strided_slice %16 {offsets = [0, 96], sizes = [2, 32], strides = [1, 1]} : vector<2x128xf32> to vector<2x32xf32>
    %39 = arith.negf %38 : vector<2x32xf32>
    %40 = math.exp %39 : vector<2x32xf32>
    %cst_20 = arith.constant 1.000000e+00 : f32
    %41 = vector.broadcast %cst_20 : f32 to vector<2x32xf32>
    %42 = arith.addf %41, %40 : vector<2x32xf32>
    %43 = arith.divf %41, %42 : vector<2x32xf32>
    %44 = arith.mulf %35, %6 : vector<2x32xf32>
    %45 = arith.mulf %29, %37 : vector<2x32xf32>
    %46 = arith.addf %44, %45 : vector<2x32xf32>
    %47 = math.tanh %46 : vector<2x32xf32>
    %48 = arith.mulf %43, %47 : vector<2x32xf32>
    %49 = vector.extract_strided_slice %23 {offsets = [0, 0], sizes = [2, 32], strides = [1, 1]} : vector<2x128xf32> to vector<2x32xf32>
    %50 = arith.negf %49 : vector<2x32xf32>
    %51 = math.exp %50 : vector<2x32xf32>
    %cst_21 = arith.constant 1.000000e+00 : f32
    %52 = vector.broadcast %cst_21 : f32 to vector<2x32xf32>
    %53 = arith.addf %52, %51 : vector<2x32xf32>
    %54 = arith.divf %52, %53 : vector<2x32xf32>
    %55 = vector.extract_strided_slice %23 {offsets = [0, 32], sizes = [2, 32], strides = [1, 1]} : vector<2x128xf32> to vector<2x32xf32>
    %56 = arith.negf %55 : vector<2x32xf32>
    %57 = math.exp %56 : vector<2x32xf32>
    %cst_22 = arith.constant 1.000000e+00 : f32
    %58 = vector.broadcast %cst_22 : f32 to vector<2x32xf32>
    %59 = arith.addf %58, %57 : vector<2x32xf32>
    %60 = arith.divf %58, %59 : vector<2x32xf32>
    %61 = vector.extract_strided_slice %23 {offsets = [0, 64], sizes = [2, 32], strides = [1, 1]} : vector<2x128xf32> to vector<2x32xf32>
    %62 = math.tanh %61 : vector<2x32xf32>
    %63 = vector.extract_strided_slice %23 {offsets = [0, 96], sizes = [2, 32], strides = [1, 1]} : vector<2x128xf32> to vector<2x32xf32>
    %64 = arith.negf %63 : vector<2x32xf32>
    %65 = math.exp %64 : vector<2x32xf32>
    %cst_23 = arith.constant 1.000000e+00 : f32
    %66 = vector.broadcast %cst_23 : f32 to vector<2x32xf32>
    %67 = arith.addf %66, %65 : vector<2x32xf32>
    %68 = arith.divf %66, %67 : vector<2x32xf32>
    %69 = arith.mulf %60, %8 : vector<2x32xf32>
    %70 = arith.mulf %54, %62 : vector<2x32xf32>
    %71 = arith.addf %69, %70 : vector<2x32xf32>
    %72 = math.tanh %71 : vector<2x32xf32>
    %73 = arith.mulf %68, %72 : vector<2x32xf32>
    %74 = arith.truncf %48 : vector<2x32xf32> to vector<2x32xbf16>
    %75 = arith.index_cast %c0_i32_12 : i32 to index
    %c0_24 = arith.constant 0 : index
    %c0_25 = arith.constant 0 : index
    %76 = vector.load %arg5[%75, %c0_24, %c0_25] : memref<4x2x32xbf16, #tpu.memory_space<vmem>>, vector<1x2x32xbf16>
    %77 = vector.shape_cast %76 : vector<1x2x32xbf16> to vector<2x32xbf16>
    %78 = vector.shape_cast %74 : vector<2x32xbf16> to vector<1x2x32xbf16>
    tpu.vector_store %arg5[%75, %c0_24, %c0_25], %78 {strides = array<i32>} : memref<4x2x32xbf16, #tpu.memory_space<vmem>>, vector<1x2x32xbf16>,
    %79 = arith.truncf %73 : vector<2x32xf32> to vector<2x32xbf16>
    %80 = arith.index_cast %9 : i32 to index
    %c0_26 = arith.constant 0 : index
    %c0_27 = arith.constant 0 : index
    %81 = vector.load %arg6[%80, %c0_26, %c0_27] : memref<4x2x32xbf16, #tpu.memory_space<vmem>>, vector<1x2x32xbf16>
    %82 = vector.shape_cast %81 : vector<1x2x32xbf16> to vector<2x32xbf16>
    %83 = vector.shape_cast %79 : vector<2x32xbf16> to vector<1x2x32xbf16>
    tpu.vector_store %arg6[%80, %c0_26, %c0_27], %83 {strides = array<i32>} : memref<4x2x32xbf16, #tpu.memory_space<vmem>>, vector<1x2x32xbf16>,
    %c1_i32 = arith.constant 1 : i32
    %c3_i32_28 = arith.constant 3 : i32
    %84 = arith.subi %c3_i32_28, %c1_i32 : i32
    %85 = arith.index_cast %c1_i32 : i32 to index
    %c0_29 = arith.constant 0 : index
    %c0_30 = arith.constant 0 : index
    %86 = vector.load %arg1[%85, %c0_29, %c0_30] : memref<4x2x128xbf16, #tpu.memory_space<vmem>>, vector<1x2x128xbf16>
    %87 = vector.shape_cast %86 : vector<1x2x128xbf16> to vector<2x128xbf16>
    %88 = arith.extf %87 : vector<2x128xbf16> to vector<2x128xf32>
    %89 = arith.truncf %48 : vector<2x32xf32> to vector<2x32xbf16>
    %cst_31 = arith.constant dense<0.000000e+00> : vector<2x128xf32>
    %90 = tpu.matmul %89, %3, %cst_31 {dimension_numbers = #tpu.dot_dimension_numbers<[1], [0], [0], [1], [0, 0, 1, 1], [], []>} : vector<2x32xbf16>, vector<32x128xbf16>, vector<2x128xf32> -> vector<2x128xf32>
    %91 = arith.addf %88, %90 : vector<2x128xf32>
    %92 = arith.index_cast %84 : i32 to index
    %c0_32 = arith.constant 0 : index
    %c0_33 = arith.constant 0 : index
    %93 = vector.load %arg2[%92, %c0_32, %c0_33] : memref<4x2x128xbf16, #tpu.memory_space<vmem>>, vector<1x2x128xbf16>
    %94 = vector.shape_cast %93 : vector<1x2x128xbf16> to vector<2x128xbf16>
    %95 = arith.extf %94 : vector<2x128xbf16> to vector<2x128xf32>
    %96 = arith.truncf %73 : vector<2x32xf32> to vector<2x32xbf16>
    %cst_34 = arith.constant dense<0.000000e+00> : vector<2x128xf32>
    %97 = tpu.matmul %96, %4, %cst_34 {dimension_numbers = #tpu.dot_dimension_numbers<[1], [0], [0], [1], [0, 0, 1, 1], [], []>} : vector<2x32xbf16>, vector<32x128xbf16>, vector<2x128xf32> -> vector<2x128xf32>
    %98 = arith.addf %95, %97 : vector<2x128xf32>
    %99 = vector.extract_strided_slice %91 {offsets = [0, 0], sizes = [2, 32], strides = [1, 1]} : vector<2x128xf32> to vector<2x32xf32>
    %100 = arith.negf %99 : vector<2x32xf32>
    %101 = math.exp %100 : vector<2x32xf32>
    %cst_35 = arith.constant 1.000000e+00 : f32
    %102 = vector.broadcast %cst_35 : f32 to vector<2x32xf32>
    %103 = arith.addf %102, %101 : vector<2x32xf32>
    %104 = arith.divf %102, %103 : vector<2x32xf32>
    %105 = vector.extract_strided_slice %91 {offsets = [0, 32], sizes = [2, 32], strides = [1, 1]} : vector<2x128xf32> to vector<2x32xf32>
    %106 = arith.negf %105 : vector<2x32xf32>
    %107 = math.exp %106 : vector<2x32xf32>
    %cst_36 = arith.constant 1.000000e+00 : f32
    %108 = vector.broadcast %cst_36 : f32 to vector<2x32xf32>
    %109 = arith.addf %108, %107 : vector<2x32xf32>
    %110 = arith.divf %108, %109 : vector<2x32xf32>
    %111 = vector.extract_strided_slice %91 {offsets = [0, 64], sizes = [2, 32], strides = [1, 1]} : vector<2x128xf32> to vector<2x32xf32>
    %112 = math.tanh %111 : vector<2x32xf32>
    %113 = vector.extract_strided_slice %91 {offsets = [0, 96], sizes = [2, 32], strides = [1, 1]} : vector<2x128xf32> to vector<2x32xf32>
    %114 = arith.negf %113 : vector<2x32xf32>
    %115 = math.exp %114 : vector<2x32xf32>
    %cst_37 = arith.constant 1.000000e+00 : f32
    %116 = vector.broadcast %cst_37 : f32 to vector<2x32xf32>
    %117 = arith.addf %116, %115 : vector<2x32xf32>
    %118 = arith.divf %116, %117 : vector<2x32xf32>
    %119 = arith.mulf %110, %46 : vector<2x32xf32>
    %120 = arith.mulf %104, %112 : vector<2x32xf32>
    %121 = arith.addf %119, %120 : vector<2x32xf32>
    %122 = math.tanh %121 : vector<2x32xf32>
    %123 = arith.mulf %118, %122 : vector<2x32xf32>
    %124 = vector.extract_strided_slice %98 {offsets = [0, 0], sizes = [2, 32], strides = [1, 1]} : vector<2x128xf32> to vector<2x32xf32>
    %125 = arith.negf %124 : vector<2x32xf32>
    %126 = math.exp %125 : vector<2x32xf32>
    %cst_38 = arith.constant 1.000000e+00 : f32
    %127 = vector.broadcast %cst_38 : f32 to vector<2x32xf32>
    %128 = arith.addf %127, %126 : vector<2x32xf32>
    %129 = arith.divf %127, %128 : vector<2x32xf32>
    %130 = vector.extract_strided_slice %98 {offsets = [0, 32], sizes = [2, 32], strides = [1, 1]} : vector<2x128xf32> to vector<2x32xf32>
    %131 = arith.negf %130 : vector<2x32xf32>
    %132 = math.exp %131 : vector<2x32xf32>
    %cst_39 = arith.constant 1.000000e+00 : f32
    %133 = vector.broadcast %cst_39 : f32 to vector<2x32xf32>
    %134 = arith.addf %133, %132 : vector<2x32xf32>
    %135 = arith.divf %133, %134 : vector<2x32xf32>
    %136 = vector.extract_strided_slice %98 {offsets = [0, 64], sizes = [2, 32], strides = [1, 1]} : vector<2x128xf32> to vector<2x32xf32>
    %137 = math.tanh %136 : vector<2x32xf32>
    %138 = vector.extract_strided_slice %98 {offsets = [0, 96], sizes = [2, 32], strides = [1, 1]} : vector<2x128xf32> to vector<2x32xf32>
    %139 = arith.negf %138 : vector<2x32xf32>
    %140 = math.exp %139 : vector<2x32xf32>
    %cst_40 = arith.constant 1.000000e+00 : f32
    %141 = vector.broadcast %cst_40 : f32 to vector<2x32xf32>
    %142 = arith.addf %141, %140 : vector<2x32xf32>
    %143 = arith.divf %141, %142 : vector<2x32xf32>
    %144 = arith.mulf %135, %71 : vector<2x32xf32>
    %145 = arith.mulf %129, %137 : vector<2x32xf32>
    %146 = arith.addf %144, %145 : vector<2x32xf32>
    %147 = math.tanh %146 : vector<2x32xf32>
    %148 = arith.mulf %143, %147 : vector<2x32xf32>
    %149 = arith.truncf %123 : vector<2x32xf32> to vector<2x32xbf16>
    %150 = arith.index_cast %c1_i32 : i32 to index
    %c0_41 = arith.constant 0 : index
    %c0_42 = arith.constant 0 : index
    %151 = vector.load %arg5[%150, %c0_41, %c0_42] : memref<4x2x32xbf16, #tpu.memory_space<vmem>>, vector<1x2x32xbf16>
    %152 = vector.shape_cast %151 : vector<1x2x32xbf16> to vector<2x32xbf16>
    %153 = vector.shape_cast %149 : vector<2x32xbf16> to vector<1x2x32xbf16>
    tpu.vector_store %arg5[%150, %c0_41, %c0_42], %153 {strides = array<i32>} : memref<4x2x32xbf16, #tpu.memory_space<vmem>>, vector<1x2x32xbf16>,
    %154 = arith.truncf %148 : vector<2x32xf32> to vector<2x32xbf16>
    %155 = arith.index_cast %84 : i32 to index
    %c0_43 = arith.constant 0 : index
    %c0_44 = arith.constant 0 : index
    %156 = vector.load %arg6[%155, %c0_43, %c0_44] : memref<4x2x32xbf16, #tpu.memory_space<vmem>>, vector<1x2x32xbf16>
    %157 = vector.shape_cast %156 : vector<1x2x32xbf16> to vector<2x32xbf16>
    %158 = vector.shape_cast %154 : vector<2x32xbf16> to vector<1x2x32xbf16>
    tpu.vector_store %arg6[%155, %c0_43, %c0_44], %158 {strides = array<i32>} : memref<4x2x32xbf16, #tpu.memory_space<vmem>>, vector<1x2x32xbf16>,
    %c2_i32 = arith.constant 2 : i32
    %c3_i32_45 = arith.constant 3 : i32
    %159 = arith.subi %c3_i32_45, %c2_i32 : i32
    %160 = arith.index_cast %c2_i32 : i32 to index
    %c0_46 = arith.constant 0 : index
    %c0_47 = arith.constant 0 : index
    %161 = vector.load %arg1[%160, %c0_46, %c0_47] : memref<4x2x128xbf16, #tpu.memory_space<vmem>>, vector<1x2x128xbf16>
    %162 = vector.shape_cast %161 : vector<1x2x128xbf16> to vector<2x128xbf16>
    %163 = arith.extf %162 : vector<2x128xbf16> to vector<2x128xf32>
    %164 = arith.truncf %123 : vector<2x32xf32> to vector<2x32xbf16>
    %cst_48 = arith.constant dense<0.000000e+00> : vector<2x128xf32>
    %165 = tpu.matmul %164, %3, %cst_48 {dimension_numbers = #tpu.dot_dimension_numbers<[1], [0], [0], [1], [0, 0, 1, 1], [], []>} : vector<2x32xbf16>, vector<32x128xbf16>, vector<2x128xf32> -> vector<2x128xf32>
    %166 = arith.addf %163, %165 : vector<2x128xf32>
    %167 = arith.index_cast %159 : i32 to index
    %c0_49 = arith.constant 0 : index
    %c0_50 = arith.constant 0 : index
    %168 = vector.load %arg2[%167, %c0_49, %c0_50] : memref<4x2x128xbf16, #tpu.memory_space<vmem>>, vector<1x2x128xbf16>
    %169 = vector.shape_cast %168 : vector<1x2x128xbf16> to vector<2x128xbf16>
    %170 = arith.extf %169 : vector<2x128xbf16> to vector<2x128xf32>
    %171 = arith.truncf %148 : vector<2x32xf32> to vector<2x32xbf16>
    %cst_51 = arith.constant dense<0.000000e+00> : vector<2x128xf32>
    %172 = tpu.matmul %171, %4, %cst_51 {dimension_numbers = #tpu.dot_dimension_numbers<[1], [0], [0], [1], [0, 0, 1, 1], [], []>} : vector<2x32xbf16>, vector<32x128xbf16>, vector<2x128xf32> -> vector<2x128xf32>
    %173 = arith.addf %170, %172 : vector<2x128xf32>
    %174 = vector.extract_strided_slice %166 {offsets = [0, 0], sizes = [2, 32], strides = [1, 1]} : vector<2x128xf32> to vector<2x32xf32>
    %175 = arith.negf %174 : vector<2x32xf32>
    %176 = math.exp %175 : vector<2x32xf32>
    %cst_52 = arith.constant 1.000000e+00 : f32
    %177 = vector.broadcast %cst_52 : f32 to vector<2x32xf32>
    %178 = arith.addf %177, %176 : vector<2x32xf32>
    %179 = arith.divf %177, %178 : vector<2x32xf32>
    %180 = vector.extract_strided_slice %166 {offsets = [0, 32], sizes = [2, 32], strides = [1, 1]} : vector<2x128xf32> to vector<2x32xf32>
    %181 = arith.negf %180 : vector<2x32xf32>
    %182 = math.exp %181 : vector<2x32xf32>
    %cst_53 = arith.constant 1.000000e+00 : f32
    %183 = vector.broadcast %cst_53 : f32 to vector<2x32xf32>
    %184 = arith.addf %183, %182 : vector<2x32xf32>
    %185 = arith.divf %183, %184 : vector<2x32xf32>
    %186 = vector.extract_strided_slice %166 {offsets = [0, 64], sizes = [2, 32], strides = [1, 1]} : vector<2x128xf32> to vector<2x32xf32>
    %187 = math.tanh %186 : vector<2x32xf32>
    %188 = vector.extract_strided_slice %166 {offsets = [0, 96], sizes = [2, 32], strides = [1, 1]} : vector<2x128xf32> to vector<2x32xf32>
    %189 = arith.negf %188 : vector<2x32xf32>
    %190 = math.exp %189 : vector<2x32xf32>
    %cst_54 = arith.constant 1.000000e+00 : f32
    %191 = vector.broadcast %cst_54 : f32 to vector<2x32xf32>
    %192 = arith.addf %191, %190 : vector<2x32xf32>
    %193 = arith.divf %191, %192 : vector<2x32xf32>
    %194 = arith.mulf %185, %121 : vector<2x32xf32>
    %195 = arith.mulf %179, %187 : vector<2x32xf32>
    %196 = arith.addf %194, %195 : vector<2x32xf32>
    %197 = math.tanh %196 : vector<2x32xf32>
    %198 = arith.mulf %193, %197 : vector<2x32xf32>
    %199 = vector.extract_strided_slice %173 {offsets = [0, 0], sizes = [2, 32], strides = [1, 1]} : vector<2x128xf32> to vector<2x32xf32>
    %200 = arith.negf %199 : vector<2x32xf32>
    %201 = math.exp %200 : vector<2x32xf32>
    %cst_55 = arith.constant 1.000000e+00 : f32
    %202 = vector.broadcast %cst_55 : f32 to vector<2x32xf32>
    %203 = arith.addf %202, %201 : vector<2x32xf32>
    %204 = arith.divf %202, %203 : vector<2x32xf32>
    %205 = vector.extract_strided_slice %173 {offsets = [0, 32], sizes = [2, 32], strides = [1, 1]} : vector<2x128xf32> to vector<2x32xf32>
    %206 = arith.negf %205 : vector<2x32xf32>
    %207 = math.exp %206 : vector<2x32xf32>
    %cst_56 = arith.constant 1.000000e+00 : f32
    %208 = vector.broadcast %cst_56 : f32 to vector<2x32xf32>
    %209 = arith.addf %208, %207 : vector<2x32xf32>
    %210 = arith.divf %208, %209 : vector<2x32xf32>
    %211 = vector.extract_strided_slice %173 {offsets = [0, 64], sizes = [2, 32], strides = [1, 1]} : vector<2x128xf32> to vector<2x32xf32>
    %212 = math.tanh %211 : vector<2x32xf32>
    %213 = vector.extract_strided_slice %173 {offsets = [0, 96], sizes = [2, 32], strides = [1, 1]} : vector<2x128xf32> to vector<2x32xf32>
    %214 = arith.negf %213 : vector<2x32xf32>
    %215 = math.exp %214 : vector<2x32xf32>
    %cst_57 = arith.constant 1.000000e+00 : f32
    %216 = vector.broadcast %cst_57 : f32 to vector<2x32xf32>
    %217 = arith.addf %216, %215 : vector<2x32xf32>
    %218 = arith.divf %216, %217 : vector<2x32xf32>
    %219 = arith.mulf %210, %146 : vector<2x32xf32>
    %220 = arith.mulf %204, %212 : vector<2x32xf32>
    %221 = arith.addf %219, %220 : vector<2x32xf32>
    %222 = math.tanh %221 : vector<2x32xf32>
    %223 = arith.mulf %218, %222 : vector<2x32xf32>
    %224 = arith.truncf %198 : vector<2x32xf32> to vector<2x32xbf16>
    %225 = arith.index_cast %c2_i32 : i32 to index
    %c0_58 = arith.constant 0 : index
    %c0_59 = arith.constant 0 : index
    %226 = vector.load %arg5[%225, %c0_58, %c0_59] : memref<4x2x32xbf16, #tpu.memory_space<vmem>>, vector<1x2x32xbf16>
    %227 = vector.shape_cast %226 : vector<1x2x32xbf16> to vector<2x32xbf16>
    %228 = vector.shape_cast %224 : vector<2x32xbf16> to vector<1x2x32xbf16>
    tpu.vector_store %arg5[%225, %c0_58, %c0_59], %228 {strides = array<i32>} : memref<4x2x32xbf16, #tpu.memory_space<vmem>>, vector<1x2x32xbf16>,
    %229 = arith.truncf %223 : vector<2x32xf32> to vector<2x32xbf16>
    %230 = arith.index_cast %159 : i32 to index
    %c0_60 = arith.constant 0 : index
    %c0_61 = arith.constant 0 : index
    %231 = vector.load %arg6[%230, %c0_60, %c0_61] : memref<4x2x32xbf16, #tpu.memory_space<vmem>>, vector<1x2x32xbf16>
    %232 = vector.shape_cast %231 : vector<1x2x32xbf16> to vector<2x32xbf16>
    %233 = vector.shape_cast %229 : vector<2x32xbf16> to vector<1x2x32xbf16>
    tpu.vector_store %arg6[%230, %c0_60, %c0_61], %233 {strides = array<i32>} : memref<4x2x32xbf16, #tpu.memory_space<vmem>>, vector<1x2x32xbf16>,
    %c3_i32_62 = arith.constant 3 : i32
    %c3_i32_63 = arith.constant 3 : i32
    %234 = arith.subi %c3_i32_63, %c3_i32_62 : i32
    %235 = arith.index_cast %c3_i32_62 : i32 to index
    %c0_64 = arith.constant 0 : index
    %c0_65 = arith.constant 0 : index
    %236 = vector.load %arg1[%235, %c0_64, %c0_65] : memref<4x2x128xbf16, #tpu.memory_space<vmem>>, vector<1x2x128xbf16>
    %237 = vector.shape_cast %236 : vector<1x2x128xbf16> to vector<2x128xbf16>
    %238 = arith.extf %237 : vector<2x128xbf16> to vector<2x128xf32>
    %239 = arith.truncf %198 : vector<2x32xf32> to vector<2x32xbf16>
    %cst_66 = arith.constant dense<0.000000e+00> : vector<2x128xf32>
    %240 = tpu.matmul %239, %3, %cst_66 {dimension_numbers = #tpu.dot_dimension_numbers<[1], [0], [0], [1], [0, 0, 1, 1], [], []>} : vector<2x32xbf16>, vector<32x128xbf16>, vector<2x128xf32> -> vector<2x128xf32>
    %241 = arith.addf %238, %240 : vector<2x128xf32>
    %242 = arith.index_cast %234 : i32 to index
    %c0_67 = arith.constant 0 : index
    %c0_68 = arith.constant 0 : index
    %243 = vector.load %arg2[%242, %c0_67, %c0_68] : memref<4x2x128xbf16, #tpu.memory_space<vmem>>, vector<1x2x128xbf16>
    %244 = vector.shape_cast %243 : vector<1x2x128xbf16> to vector<2x128xbf16>
    %245 = arith.extf %244 : vector<2x128xbf16> to vector<2x128xf32>
    %246 = arith.truncf %223 : vector<2x32xf32> to vector<2x32xbf16>
    %cst_69 = arith.constant dense<0.000000e+00> : vector<2x128xf32>
    %247 = tpu.matmul %246, %4, %cst_69 {dimension_numbers = #tpu.dot_dimension_numbers<[1], [0], [0], [1], [0, 0, 1, 1], [], []>} : vector<2x32xbf16>, vector<32x128xbf16>, vector<2x128xf32> -> vector<2x128xf32>
    %248 = arith.addf %245, %247 : vector<2x128xf32>
    %249 = vector.extract_strided_slice %241 {offsets = [0, 0], sizes = [2, 32], strides = [1, 1]} : vector<2x128xf32> to vector<2x32xf32>
    %250 = arith.negf %249 : vector<2x32xf32>
    %251 = math.exp %250 : vector<2x32xf32>
    %cst_70 = arith.constant 1.000000e+00 : f32
    %252 = vector.broadcast %cst_70 : f32 to vector<2x32xf32>
    %253 = arith.addf %252, %251 : vector<2x32xf32>
    %254 = arith.divf %252, %253 : vector<2x32xf32>
    %255 = vector.extract_strided_slice %241 {offsets = [0, 32], sizes = [2, 32], strides = [1, 1]} : vector<2x128xf32> to vector<2x32xf32>
    %256 = arith.negf %255 : vector<2x32xf32>
    %257 = math.exp %256 : vector<2x32xf32>
    %cst_71 = arith.constant 1.000000e+00 : f32
    %258 = vector.broadcast %cst_71 : f32 to vector<2x32xf32>
    %259 = arith.addf %258, %257 : vector<2x32xf32>
    %260 = arith.divf %258, %259 : vector<2x32xf32>
    %261 = vector.extract_strided_slice %241 {offsets = [0, 64], sizes = [2, 32], strides = [1, 1]} : vector<2x128xf32> to vector<2x32xf32>
    %262 = math.tanh %261 : vector<2x32xf32>
    %263 = vector.extract_strided_slice %241 {offsets = [0, 96], sizes = [2, 32], strides = [1, 1]} : vector<2x128xf32> to vector<2x32xf32>
    %264 = arith.negf %263 : vector<2x32xf32>
    %265 = math.exp %264 : vector<2x32xf32>
    %cst_72 = arith.constant 1.000000e+00 : f32
    %266 = vector.broadcast %cst_72 : f32 to vector<2x32xf32>
    %267 = arith.addf %266, %265 : vector<2x32xf32>
    %268 = arith.divf %266, %267 : vector<2x32xf32>
    %269 = arith.mulf %260, %196 : vector<2x32xf32>
    %270 = arith.mulf %254, %262 : vector<2x32xf32>
    %271 = arith.addf %269, %270 : vector<2x32xf32>
    %272 = math.tanh %271 : vector<2x32xf32>
    %273 = arith.mulf %268, %272 : vector<2x32xf32>
    %274 = vector.extract_strided_slice %248 {offsets = [0, 0], sizes = [2, 32], strides = [1, 1]} : vector<2x128xf32> to vector<2x32xf32>
    %275 = arith.negf %274 : vector<2x32xf32>
    %276 = math.exp %275 : vector<2x32xf32>
    %cst_73 = arith.constant 1.000000e+00 : f32
    %277 = vector.broadcast %cst_73 : f32 to vector<2x32xf32>
    %278 = arith.addf %277, %276 : vector<2x32xf32>
    %279 = arith.divf %277, %278 : vector<2x32xf32>
    %280 = vector.extract_strided_slice %248 {offsets = [0, 32], sizes = [2, 32], strides = [1, 1]} : vector<2x128xf32> to vector<2x32xf32>
    %281 = arith.negf %280 : vector<2x32xf32>
    %282 = math.exp %281 : vector<2x32xf32>
    %cst_74 = arith.constant 1.000000e+00 : f32
    %283 = vector.broadcast %cst_74 : f32 to vector<2x32xf32>
    %284 = arith.addf %283, %282 : vector<2x32xf32>
    %285 = arith.divf %283, %284 : vector<2x32xf32>
    %286 = vector.extract_strided_slice %248 {offsets = [0, 64], sizes = [2, 32], strides = [1, 1]} : vector<2x128xf32> to vector<2x32xf32>
    %287 = math.tanh %286 : vector<2x32xf32>
    %288 = vector.extract_strided_slice %248 {offsets = [0, 96], sizes = [2, 32], strides = [1, 1]} : vector<2x128xf32> to vector<2x32xf32>
    %289 = arith.negf %288 : vector<2x32xf32>
    %290 = math.exp %289 : vector<2x32xf32>
    %cst_75 = arith.constant 1.000000e+00 : f32
    %291 = vector.broadcast %cst_75 : f32 to vector<2x32xf32>
    %292 = arith.addf %291, %290 : vector<2x32xf32>
    %293 = arith.divf %291, %292 : vector<2x32xf32>
    %294 = arith.mulf %285, %221 : vector<2x32xf32>
    %295 = arith.mulf %279, %287 : vector<2x32xf32>
    %296 = arith.addf %294, %295 : vector<2x32xf32>
    %297 = math.tanh %296 : vector<2x32xf32>
    %298 = arith.mulf %293, %297 : vector<2x32xf32>
    %299 = arith.truncf %273 : vector<2x32xf32> to vector<2x32xbf16>
    %300 = arith.index_cast %c3_i32_62 : i32 to index
    %c0_76 = arith.constant 0 : index
    %c0_77 = arith.constant 0 : index
    %301 = vector.load %arg5[%300, %c0_76, %c0_77] : memref<4x2x32xbf16, #tpu.memory_space<vmem>>, vector<1x2x32xbf16>
    %302 = vector.shape_cast %301 : vector<1x2x32xbf16> to vector<2x32xbf16>
    %303 = vector.shape_cast %299 : vector<2x32xbf16> to vector<1x2x32xbf16>
    tpu.vector_store %arg5[%300, %c0_76, %c0_77], %303 {strides = array<i32>} : memref<4x2x32xbf16, #tpu.memory_space<vmem>>, vector<1x2x32xbf16>,
    %304 = arith.truncf %298 : vector<2x32xf32> to vector<2x32xbf16>
    %305 = arith.index_cast %234 : i32 to index
    %c0_78 = arith.constant 0 : index
    %c0_79 = arith.constant 0 : index
    %306 = vector.load %arg6[%305, %c0_78, %c0_79] : memref<4x2x32xbf16, #tpu.memory_space<vmem>>, vector<1x2x32xbf16>
    %307 = vector.shape_cast %306 : vector<1x2x32xbf16> to vector<2x32xbf16>
    %308 = vector.shape_cast %304 : vector<2x32xbf16> to vector<1x2x32xbf16>
    tpu.vector_store %arg6[%305, %c0_78, %c0_79], %308 {strides = array<i32>} : memref<4x2x32xbf16, #tpu.memory_space<vmem>>, vector<1x2x32xbf16>,
    %c4_i32 = arith.constant 4 : i32
    %c0_80 = arith.constant 0 : index
    %c0_81 = arith.constant 0 : index
    %309 = vector.load %arg7[%c0_80, %c0_81] : memref<2x32xf32, #tpu.memory_space<vmem>>, vector<2x32xf32>
    tpu.vector_store %arg7[%c0_80, %c0_81], %273 {strides = array<i32>} : memref<2x32xf32, #tpu.memory_space<vmem>>, vector<2x32xf32>,
    %c0_82 = arith.constant 0 : index
    %c0_83 = arith.constant 0 : index
    %310 = vector.load %arg8[%c0_82, %c0_83] : memref<2x32xf32, #tpu.memory_space<vmem>>, vector<2x32xf32>
    tpu.vector_store %arg8[%c0_82, %c0_83], %271 {strides = array<i32>} : memref<2x32xf32, #tpu.memory_space<vmem>>, vector<2x32xf32>,
    %c0_84 = arith.constant 0 : index
    %c0_85 = arith.constant 0 : index
    %311 = vector.load %arg9[%c0_84, %c0_85] : memref<2x32xf32, #tpu.memory_space<vmem>>, vector<2x32xf32>
    tpu.vector_store %arg9[%c0_84, %c0_85], %298 {strides = array<i32>} : memref<2x32xf32, #tpu.memory_space<vmem>>, vector<2x32xf32>,
    %c0_86 = arith.constant 0 : index
    %c0_87 = arith.constant 0 : index
    %312 = vector.load %arg10[%c0_86, %c0_87] : memref<2x32xf32, #tpu.memory_space<vmem>>, vector<2x32xf32>
    tpu.vector_store %arg10[%c0_86, %c0_87], %296 {strides = array<i32>} : memref<2x32xf32, #tpu.memory_space<vmem>>, vector<2x32xf32>,
    return
  }
  func.func @transform_0(%arg0: i32) -> (i32, i32, i32) {
    %c0_i32 = arith.constant 0 : i32
    %c0_i32_0 = arith.constant 0 : i32
    %c0_i32_1 = arith.constant 0 : i32
    return %arg0, %c0_i32, %c0_i32_0 : i32, i32, i32
  }
  func.func @transform_1(%arg0: i32) -> (i32, i32, i32) {
    %c1_i32 = arith.constant 1 : i32
    %0 = arith.subi %c1_i32, %arg0 : i32
    %c0_i32 = arith.constant 0 : i32
    %c1_i32_0 = arith.constant 1 : i32
    %c0_i32_1 = arith.constant 0 : i32
    return %0, %c0_i32, %c1_i32_0 : i32, i32, i32
  }
  func.func @transform_2(%arg0: i32) -> (i32, i32) {
    %c0_i32 = arith.constant 0 : i32
    %c0_i32_0 = arith.constant 0 : i32
    %c0_i32_1 = arith.constant 0 : i32
    return %c0_i32, %c0_i32_0 : i32, i32
  }
  func.func @transform_3(%arg0: i32) -> (i32, i32) {
    %c0_i32 = arith.constant 0 : i32
    %c0_i32_0 = arith.constant 0 : i32
    %c0_i32_1 = arith.constant 0 : i32
    return %c0_i32, %c0_i32_0 : i32, i32
  }
  func.func @transform_4(%arg0: i32) -> (i32, i32, i32) {
    %c0_i32 = arith.constant 0 : i32
    %c0_i32_0 = arith.constant 0 : i32
    %c0_i32_1 = arith.constant 0 : i32
    return %arg0, %c0_i32, %c0_i32_0 : i32, i32, i32
  }
  func.func @transform_5(%arg0: i32) -> (i32, i32, i32) {
    %c1_i32 = arith.constant 1 : i32
    %0 = arith.subi %c1_i32, %arg0 : i32
    %c0_i32 = arith.constant 0 : i32
    %c0_i32_0 = arith.constant 0 : i32
    %c0_i32_1 = arith.constant 0 : i32
    return %0, %c0_i32, %c0_i32_0 : i32, i32, i32
  }
}

</mosaic_0001>

<llo_original>
// kernel: tpu_custom_call.1
$region0: #{tpu_custom_call.1}
  #allocation0 [shape = 'u32[]', space=smem, size = 0x4, offset = 0x4, fixed_abs, tag = 'smem constant byte address 0x4 - core index']
  #allocation1 [shape = 'u32[144,128]{1,0:T(1,128)}', space=vmem, size = 0x12000, scoped, tag = 'internal scratch']
  #allocation2 [shape = 'f32[2,32]{1,0:T(2,128)}', space=vmem, size = 0x400, scoped, tag = 'scratch operand']
  #allocation3 [shape = 'f32[2,32]{1,0:T(2,128)}', space=vmem, size = 0x400, scoped, tag = 'scratch operand']
  #allocation4 [shape = 'f32[2,32]{1,0:T(2,128)}', space=vmem, size = 0x400, scoped, tag = 'scratch operand']
  #allocation5 [shape = 'f32[2,32]{1,0:T(2,128)}', space=vmem, size = 0x400, scoped, tag = 'scratch operand']
  %s0 = inlined_call_operand.hbm [shape: bf16[8,2,256], index: 0, kind: input, shape index: {}]
  %s1 = inlined_call_operand.hbm [shape: bf16[8,2,256], index: 1, kind: input, shape index: {}]
  %s2 = inlined_call_operand.hbm [shape: bf16[32,128], index: 2, kind: input, shape index: {}]
  %s3 = inlined_call_operand.hbm [shape: bf16[32,128], index: 3, kind: input, shape index: {}]
  %s4 = inlined_call_operand.hbm [shape: bf16[8,2,32], index: 4, kind: output, shape index: {0}]
  %s5 = inlined_call_operand.hbm [shape: bf16[8,2,32], index: 5, kind: output, shape index: {1}]
  %6 = xla_tuple %s4, %s5
  %s7 = sld [smem:[#allocation0]]
  $region77: #{tpu_custom_call.1} parent=0
    _
  %s9 = ssub.s32 1, %s7
  %s10 = scalar_select 0, %s9, %s7
  $region1: #{tpu_custom_call.1} parent=0
    #allocation6 [shape = 'u8[4096]{0}', space=vmem, size = 0x1000, scoped, tag = 'input window, operand 0']
    #allocation7 [shape = 's32[2]{0}', space=sflag, size = 0x8, scoped, tag = 'scoped memory for tpu_custom_call.1']
    #allocation8 [shape = 's32[2]{0}', space=sflag, size = 0x8, scoped, tag = 'scoped memory for tpu_custom_call.1']
    #allocation9 [shape = 'u8[4096]{0}', space=vmem, size = 0x1000, scoped, tag = 'input window, operand 1']
    #allocation10 [shape = 's32[2]{0}', space=sflag, size = 0x8, scoped, tag = 'scoped memory for tpu_custom_call.1']
    #allocation11 [shape = 'u8[8192]{0}', space=vmem, size = 0x2000, scoped, tag = 'input window, operand 2, single buffered']
    #allocation12 [shape = 'u8[8192]{0}', space=vmem, size = 0x2000, scoped, tag = 'input window, operand 3, single buffered']
    #allocation13 [shape = 's32[1]{0}', space=sflag, size = 0x4, scoped, tag = 'scoped memory for tpu_custom_call.1']
    #allocation14 [shape = 'u8[4096]{0}', space=vmem, size = 0x1000, scoped, tag = 'output window, operand 0']
    #allocation15 [shape = 'u8[4096]{0}', space=vmem, size = 0x1000, scoped, tag = 'output window, operand 1']
    #allocation16 [shape = 's32[2]{0}', space=sflag, size = 0x8, scoped, tag = 'scoped memory for tpu_custom_call.1']
    %11 = vsyncpa [#allocation7], 0
    %s12 = scalar_lea.sflag [#allocation7], 1
    %13 = vsyncpa %s12, 0
    %14 = vsyncpa [#allocation10], 0
    %s15 = scalar_lea.sflag [#allocation10], 1
    %16 = vsyncpa %s15, 0
    %17 = vsyncpa [#allocation13], 0
    %18 = vsyncpa [#allocation8], 0
    %s19 = scalar_lea.sflag [#allocation8], 1
    %20 = vsyncpa %s19, 0
    %21 = vsyncpa [#allocation16], 0
    %s22 = scalar_lea.sflag [#allocation16], 1
    %23 = vsyncpa %s22, 0
    loop: start=0, step=1, limit=4
    $region2: #{tpu_custom_call.1} parent=1 // loop_pre_header
      _
    $region3: #{tpu_custom_call.1} parent=1 // loop_header
      %s25 = sphi 0, %s29
      %p26 = scmp.ge.s32.totalorder %s25, 4
      %s35 = sphi 0, %s37
      %s38 = sphi 0, %s35
      %s39 = sphi 0, %s38
      %s55 = sphi 0, %s39
      %s63 = sphi 0, %s65
      %s66 = sphi 0, %s63
      %s67 = sphi 0, %s66
      %s83 = sphi 0, %s67
      %s87 = sphi 0, %s87
      %s89 = sphi 0, %s87
      %s90 = sphi 0, %s89
      %s104 = sphi 0, %s90
      %s108 = sphi 0, %s108
      %s110 = sphi 0, %s108
      %s111 = sphi 0, %s110
      %s125 = sphi 0, %s111
      %s131 = sphi 0, %s133
      %s134 = sphi 0, %s131
      %s135 = sphi 0, %s134
      %s151 = sphi 0, %s135
      %s159 = sphi 0, %s161
      %s162 = sphi 0, %s159
      %s163 = sphi 0, %s162
      %s179 = sphi 0, %s163
    $region4: #{tpu_custom_call.1} parent=1 // loop_header_branch
      %28 = sbr.rel (%p26) target = $region8
    $region5: #{tpu_custom_call.1} parent=1 // loop_body
      %s30 = ssub.s32 %s25, 1
      %s31 = ssub.s32 %s25, 2
      %s32 = sadd.s32 %s25, 1
      %s33 = ssub.s32 %s25, %s32
      %p34 = scmp.eq.s32.totalorder %s33, 0
      %s36 = sadd.s32 %s35, 1
      %s37 = scalar_select %p34, %s35, %s36
      %p40 = pneg %p34
      %p41 = scmp.eq.s32.totalorder %s25, 1
      %p42 = por %p40, %p41
      %p43 = scmp.ne.s32.totalorder %s35, %s38
      %p44 = scmp.eq.s32.totalorder %s25, 0
      %p45 = por %p43, %p44
      %p46 = scmp.ne.s32.totalorder %s35, %s38
      %p47 = scmp.eq.s32.totalorder %s30, 1
      %p48 = por %p46, %p47
      %p49 = scmp.ne.s32.totalorder %s38, %s39
      %p50 = scmp.eq.s32.totalorder %s30, 0
      %p51 = por %p49, %p50
      %p52 = scmp.ne.s32.totalorder %s38, %s39
      %p53 = scmp.eq.s32.totalorder %s31, 1
      %p54 = por %p52, %p53
      %p56 = scmp.ne.s32.totalorder %s39, %s55
      %p57 = scmp.eq.s32.totalorder %s31, 0
      %p58 = por %p56, %p57
      %s59 = ssub.s32 1, %s25
      %s60 = ssub.s32 1, %s32
      %s61 = ssub.s32 %s59, %s60
      %p62 = scmp.eq.s32.totalorder %s61, 0
      %s64 = sadd.s32 %s63, 1
      %s65 = scalar_select %p62, %s63, %s64
      %p68 = pneg %p62
      %p69 = scmp.eq.s32.totalorder %s25, 1
      %p70 = por %p68, %p69
      %p71 = scmp.ne.s32.totalorder %s63, %s66
      %p72 = scmp.eq.s32.totalorder %s25, 0
      %p73 = por %p71, %p72
      %p74 = scmp.ne.s32.totalorder %s63, %s66
      %p75 = scmp.eq.s32.totalorder %s30, 1
      %p76 = por %p74, %p75
      %p77 = scmp.ne.s32.totalorder %s66, %s67
      %p78 = scmp.eq.s32.totalorder %s30, 0
      %p79 = por %p77, %p78
      %p80 = scmp.ne.s32.totalorder %s66, %s67
      %p81 = scmp.eq.s32.totalorder %s31, 1
      %p82 = por %p80, %p81
      %p84 = scmp.ne.s32.totalorder %s67, %s83
      %p85 = scmp.eq.s32.totalorder %s31, 0
      %p86 = por %p84, %p85
      %s88 = sadd.s32 %s87, 1
      %p91 = scmp.eq.s32.totalorder %s25, 1
      %p92 = scmp.ne.s32.totalorder %s87, %s89
      %p93 = scmp.eq.s32.totalorder %s25, 0
      %p94 = por %p92, %p93
      %p95 = scmp.ne.s32.totalorder %s87, %s89
      %p96 = scmp.eq.s32.totalorder %s30, 1
      %p97 = por %p95, %p96
      %p98 = scmp.ne.s32.totalorder %s89, %s90
      %p99 = scmp.eq.s32.totalorder %s30, 0
      %p100 = por %p98, %p99
      %p101 = scmp.ne.s32.totalorder %s89, %s90
      %p102 = scmp.eq.s32.totalorder %s31, 1
      %p103 = por %p101, %p102
      %p105 = scmp.ne.s32.totalorder %s90, %s104
      %p106 = scmp.eq.s32.totalorder %s31, 0
      %p107 = por %p105, %p106
      %s109 = sadd.s32 %s108, 1
      %p112 = scmp.eq.s32.totalorder %s25, 1
      %p113 = scmp.ne.s32.totalorder %s108, %s110
      %p114 = scmp.eq.s32.totalorder %s25, 0
      %p115 = por %p113, %p114
      %p116 = scmp.ne.s32.totalorder %s108, %s110
      %p117 = scmp.eq.s32.totalorder %s30, 1
      %p118 = por %p116, %p117
      %p119 = scmp.ne.s32.totalorder %s110, %s111
      %p120 = scmp.eq.s32.totalorder %s30, 0
      %p121 = por %p119, %p120
      %p122 = scmp.ne.s32.totalorder %s110, %s111
      %p123 = scmp.eq.s32.totalorder %s31, 1
      %p124 = por %p122, %p123
      %p126 = scmp.ne.s32.totalorder %s111, %s125
      %p127 = scmp.eq.s32.totalorder %s31, 0
      %p128 = por %p126, %p127
      %s129 = ssub.s32 %s25, %s32
      %p130 = scmp.eq.s32.totalorder %s129, 0
      %s132 = sadd.s32 %s131, 1
      %s133 = scalar_select %p130, %s131, %s132
      %p136 = pneg %p130
      %p137 = scmp.eq.s32.totalorder %s25, 1
      %p138 = por %p136, %p137
      %p139 = scmp.ne.s32.totalorder %s131, %s134
      %p140 = scmp.eq.s32.totalorder %s25, 0
      %p141 = por %p139, %p140
      %p142 = scmp.ne.s32.totalorder %s131, %s134
      %p143 = scmp.eq.s32.totalorder %s30, 1
      %p144 = por %p142, %p143
      %p145 = scmp.ne.s32.totalorder %s134, %s135
      %p146 = scmp.eq.s32.totalorder %s30, 0
      %p147 = por %p145, %p146
      %p148 = scmp.ne.s32.totalorder %s134, %s135
      %p149 = scmp.eq.s32.totalorder %s31, 1
      %p150 = por %p148, %p149
      %p152 = scmp.ne.s32.totalorder %s135, %s151
      %p153 = scmp.eq.s32.totalorder %s31, 0
      %p154 = por %p152, %p153
      %s155 = ssub.s32 1, %s25
      %s156 = ssub.s32 1, %s32
      %s157 = ssub.s32 %s155, %s156
      %p158 = scmp.eq.s32.totalorder %s157, 0
      %s160 = sadd.s32 %s159, 1
      %s161 = scalar_select %p158, %s159, %s160
      %p164 = pneg %p158
      %p165 = scmp.eq.s32.totalorder %s25, 1
      %p166 = por %p164, %p165
      %p167 = scmp.ne.s32.totalorder %s159, %s162
      %p168 = scmp.eq.s32.totalorder %s25, 0
      %p169 = por %p167, %p168
      %p170 = scmp.ne.s32.totalorder %s159, %s162
      %p171 = scmp.eq.s32.totalorder %s30, 1
      %p172 = por %p170, %p171
      %p173 = scmp.ne.s32.totalorder %s162, %s163
      %p174 = scmp.eq.s32.totalorder %s30, 0
      %p175 = por %p173, %p174
      %p176 = scmp.ne.s32.totalorder %s162, %s163
      %p177 = scmp.eq.s32.totalorder %s31, 1
      %p178 = por %p176, %p177
      %p180 = scmp.ne.s32.totalorder %s163, %s179
      %p181 = scmp.eq.s32.totalorder %s31, 0
      %p182 = por %p180, %p181
      %p183 = scmp.le.s32.totalorder 1, %s25
      %p184 = scmp.lt.s32.totalorder %s25, 3
      %p185 = pnand %p183, %p184
      %p186 = pneg %p185
      // Predicated region
      $region9: #{tpu_custom_call.1} parent=5 // pred_check
        _
      $region10: #{tpu_custom_call.1} parent=5 // pred_check_branch
        %188 = sbr.rel (%p185) target = $region12
      $region11: #{tpu_custom_call.1} parent=5 // pred_region
        %s189 = ssub.s32 %s25, 1
        // Predicated region
        $region13: #{tpu_custom_call.1} parent=11 // pred_check
          %p190 = pneg %p100
        $region14: #{tpu_custom_call.1} parent=11 // pred_check_branch
          %192 = sbr.rel (%p190) target = $region16
        $region15: #{tpu_custom_call.1} parent=11 // pred_region
          %s194 = ssub.s32 256, 256
          %195 = vsyncadd [#allocation10], %s194
          %s196 = sshll.u32 [#allocation11], 4
          %s197 = int_to_ptr.vmem [resolvable:$true] %s196
          %202 = dma.hbm_to_vmem [thread:$0]  %s2, 256, %s197, [#allocation10], 64, 64, 4
        $region16: #{tpu_custom_call.1} parent=11 // pred_fallthru
          _
        // Predicated region
        $region17: #{tpu_custom_call.1} parent=11 // pred_check
          %p203 = pneg %p121
        $region18: #{tpu_custom_call.1} parent=11 // pred_check_branch
          %205 = sbr.rel (%p203) target = $region20
        $region19: #{tpu_custom_call.1} parent=11 // pred_region
          %s207 = ssub.s32 256, 256
          %208 = vsyncadd [#allocation13], %s207
          %s209 = sshll.u32 [#allocation12], 4
          %s210 = int_to_ptr.vmem [resolvable:$true] %s209
          %215 = dma.hbm_to_vmem [thread:$0]  %s3, 256, %s210, [#allocation13], 64, 64, 4
        $region20: #{tpu_custom_call.1} parent=11 // pred_fallthru
          _
      $region12: #{tpu_custom_call.1} parent=5 // pred_fallthru
        _
      %p216 = scmp.lt.s32.totalorder %s25, 2
      // Predicated region
      $region21: #{tpu_custom_call.1} parent=5 // pred_check
        %p217 = pneg %p216
      $region22: #{tpu_custom_call.1} parent=5 // pred_check_branch
        %219 = sbr.rel (%p217) target = $region24
      $region23: #{tpu_custom_call.1} parent=5 // pred_region
        // Predicated region
        $region25: #{tpu_custom_call.1} parent=23 // pred_check
          %p220 = pneg %p45
        $region26: #{tpu_custom_call.1} parent=23 // pred_check_branch
          %222 = sbr.rel (%p220) target = $region28
        $region27: #{tpu_custom_call.1} parent=23 // pred_region
          %s223 = sand.u32 %s35, 1
          %s224 = scalar_lea.sflag [#allocation7], %s223
          %s225 = sand.u32 %s35, 1
          %s226 = smul.addr %s225, 4
          %s227 = scalar_lea.vmem [#allocation6], %s226
          %s228 = smul.u32 4, %s25
          %s230 = ssub.s32 64, 64
          %231 = vsyncadd %s224, %s230
          %s232 = smul.addr %s228, 2
          %s233 = smul.addr %s232, 16
          %s234 = scalar_lea.hbm %s0, %s233
          %s235 = sshll.u32 %s227, 4
          %s236 = int_to_ptr.vmem [resolvable:$true] %s235
          %241 = dma.hbm_to_vmem [thread:$0]  %s234, 64, %s236, %s224, 32, 16, 1
        $region28: #{tpu_custom_call.1} parent=23 // pred_fallthru
          _
        // Predicated region
        $region29: #{tpu_custom_call.1} parent=23 // pred_check
          %p242 = pneg %p73
        $region30: #{tpu_custom_call.1} parent=23 // pred_check_branch
          %244 = sbr.rel (%p242) target = $region32
        $region31: #{tpu_custom_call.1} parent=23 // pred_region
          %s245 = sand.u32 %s25, 1
          %s246 = scalar_lea.sflag [#allocation10], %s245
          %s247 = sand.u32 %s63, 1
          %s248 = smul.addr %s247, 4
          %s249 = scalar_lea.vmem [#allocation9], %s248
          %s250 = ssub.s32 1, %s25
          %s251 = smul.u32 4, %s250
          %s253 = ssub.s32 64, 64
          %254 = vsyncadd %s246, %s253
          %s255 = smul.addr %s251, 2
          %s256 = sadd.s32 1, %s255
          %s257 = smul.addr %s256, 16
          %s258 = scalar_lea.hbm %s1, %s257
          %s259 = sshll.u32 %s249, 4
          %s260 = int_to_ptr.vmem [resolvable:$true] %s259
          %265 = dma.hbm_to_vmem [thread:$0]  %s258, 64, %s260, %s246, 32, 16, 1
        $region32: #{tpu_custom_call.1} parent=23 // pred_fallthru
          _
      $region24: #{tpu_custom_call.1} parent=5 // pred_fallthru
        _
      %p266 = scmp.le.s32.totalorder 1, %s25
      %p267 = scmp.lt.s32.totalorder %s25, 3
      %p268 = pnand %p266, %p267
      %p269 = pneg %p268
      // Predicated region
      $region33: #{tpu_custom_call.1} parent=5 // pred_check
        _
      $region34: #{tpu_custom_call.1} parent=5 // pred_check_branch
        %271 = sbr.rel (%p268) target = $region36
      $region35: #{tpu_custom_call.1} parent=5 // pred_region
        %s272 = ssub.s32 %s25, 1
        %s273 = sand.u32 %s38, 1
        %s274 = scalar_lea.sflag [#allocation7], %s273
        %s275 = sand.u32 %s38, 1
        %s276 = smul.addr %s275, 4
        %s277 = scalar_lea.vmem [#allocation6], %s276
        // Predicated region
        $region37: #{tpu_custom_call.1} parent=35 // pred_check
          %p278 = pneg %p51
        $region38: #{tpu_custom_call.1} parent=35 // pred_check_branch
          %280 = sbr.rel (%p278) target = $region40
        $region39: #{tpu_custom_call.1} parent=35 // pred_region
          %281 = dma.done %s274, 64
        $region40: #{tpu_custom_call.1} parent=35 // pred_fallthru
          _
        %s282 = sand.u32 %s30, 1
        %s283 = scalar_lea.sflag [#allocation10], %s282
        %s284 = sand.u32 %s66, 1
        %s285 = smul.addr %s284, 4
        %s286 = scalar_lea.vmem [#allocation9], %s285
        // Predicated region
        $region41: #{tpu_custom_call.1} parent=35 // pred_check
          %p287 = pneg %p79
        $region42: #{tpu_custom_call.1} parent=35 // pred_check_branch
          %289 = sbr.rel (%p287) target = $region44
        $region43: #{tpu_custom_call.1} parent=35 // pred_region
          %290 = dma.done %s283, 64
        $region44: #{tpu_custom_call.1} parent=35 // pred_fallthru
          _
        // Predicated region
        $region45: #{tpu_custom_call.1} parent=35 // pred_check
          %p291 = pneg %p100
        $region46: #{tpu_custom_call.1} parent=35 // pred_check_branch
          %293 = sbr.rel (%p291) target = $region48
        $region47: #{tpu_custom_call.1} parent=35 // pred_region
          %294 = dma.done [#allocation10], 256
        $region48: #{tpu_custom_call.1} parent=35 // pred_fallthru
          _
        // Predicated region
        $region49: #{tpu_custom_call.1} parent=35 // pred_check
          %p295 = pneg %p121
        $region50: #{tpu_custom_call.1} parent=35 // pred_check_branch
          %297 = sbr.rel (%p295) target = $region52
        $region51: #{tpu_custom_call.1} parent=35 // pred_region
          %298 = dma.done [#allocation13], 256
        $region52: #{tpu_custom_call.1} parent=35 // pred_fallthru
          _
        %s299 = sand.u32 %s38, 1
        %s300 = scalar_lea.sflag [#allocation7], %s299
        %s301 = sand.u32 %s38, 1
        %s302 = smul.addr %s301, 4
        %s303 = scalar_lea.vmem [#allocation6], %s302
        %p304 = pneg %p51
        %p305 = pneg %p48
        %s306 = sand.u32 %s30, 1
        %s307 = scalar_lea.sflag [#allocation10], %s306
        %s308 = sand.u32 %s66, 1
        %s309 = smul.addr %s308, 4
        %s310 = scalar_lea.vmem [#allocation9], %s309
        %p311 = pneg %p79
        %p312 = pneg %p76
        %p313 = pneg %p100
        %p314 = pneg %p97
        %p315 = pneg %p121
        %p316 = pneg %p118
        %p317 = pneg %p147
        %p318 = pneg %p144
        %s319 = sand.u32 %s134, 1
        %s320 = scalar_lea.sflag [#allocation8], %s319
        %s321 = sand.u32 %s134, 1
        %s322 = smul.addr %s321, 4
        %s323 = scalar_lea.vmem [#allocation14], %s322
        %p324 = pneg %p175
        %p325 = pneg %p172
        %s326 = sand.u32 %s162, 1
        %s327 = scalar_lea.sflag [#allocation16], %s326
        %s328 = sand.u32 %s162, 1
        %s329 = smul.addr %s328, 4
        %s330 = scalar_lea.vmem [#allocation15], %s329
        %s331 = smul.u32 4, %s30
        %s332 = ssub.s32 1, %s30
        %s333 = smul.u32 4, %s332
        %s334 = smul.u32 4, %s30
        %s335 = ssub.s32 1, %s30
        %s336 = smul.u32 4, %s335
        %p338 = scmp.eq.s32.totalorder %s30, 0
        // Predicated region
        $region53: #{tpu_custom_call.1} parent=35 // pred_check
          %p339 = pneg %p338
        $region54: #{tpu_custom_call.1} parent=35 // pred_check_branch
          %341 = sbr.rel (%p339) target = $region56
        $region55: #{tpu_custom_call.1} parent=35 // pred_region
          %vm342 = vcmask 254976
          %343 = vst.msk [vmem:[#allocation2] sm:$0x3] %vm342, 0.0
          %344 = vst.msk [vmem:[#allocation3] sm:$0x3] %vm342, 0.0
          %345 = vst.msk [vmem:[#allocation4] sm:$0x3] %vm342, 0.0
          %346 = vst.msk [vmem:[#allocation5] sm:$0x3] %vm342, 0.0
        $region56: #{tpu_custom_call.1} parent=35 // pred_fallthru
          _
        %v347 = vld [vmem:[#allocation11] sm:$0xf]
        %v348 = vld [vmem:[#allocation11 + $0x4] sm:$0xf]
        %v349 = vld [vmem:[#allocation11 + $0x8] sm:$0xf]
        %v350 = vld [vmem:[#allocation11 + $0xc] sm:$0xf]
        %v351 = vld [vmem:[#allocation12] sm:$0xf]
        %v352 = vld [vmem:[#allocation12 + $0x4] sm:$0xf]
        %v353 = vld [vmem:[#allocation12 + $0x8] sm:$0xf]
        %v354 = vld [vmem:[#allocation12 + $0xc] sm:$0xf]
        %v355 = vld [vmem:[#allocation2] sm:$0x3]
        %v356 = vld [vmem:[#allocation3] sm:$0x3]
        %v357 = vld [vmem:[#allocation4] sm:$0x3]
        %v358 = vld [vmem:[#allocation5] sm:$0x3]
        %v359 = vld [vmem:[%s277] sm:$0x1]
        %v360 = vunpack.c.l.bf16 %v359
        %v361 = vpack.c.bf16 %v355, %v355
        %v366 = vunpack.c.l.b16 %v347
        %v367 = vunpack.c.l.b16 %v348
        %v368 = vunpack.c.l.b16 %v349
        %v369 = vunpack.c.l.b16 %v350
        %v370 = vpack.c.b16 %v367, %v366
        %v371 = vpack.c.b16 %v369, %v368
        %vm374 = vcmask 261120
        %v376 = vsel %vm374, %v361, 0
        %378 = vmatprep.subr.bf16.mxu0 0
        %379 = vmatpush1.bf16.msra.mxu0 %v370
        %380 = vmatprep.subr.bf16.mxu0 0
        %381 = vmatpush1.bf16.msra.mxu0 %v371
        %382 = vmatprep.subr.bf16.mxu0 0
        %383 = vmatpush1.bf16.msra.mxu0 0
        %384 = vmatprep.subr.bf16.mxu0 0
        %385 = vmatpush1.bf16.msra.mxu0 0
        %386 = vmatprep.subr.bf16.mxu0 0
        %387 = vmatpush1.bf16.msra.mxu0 0
        %388 = vmatprep.subr.bf16.mxu0 0
        %389 = vmatpush1.bf16.msra.mxu0 0
        %390 = vmatprep.subr.bf16.mxu0 0
        %391 = vmatpush1.bf16.msra.mxu0 0
        %392 = vmatprep.subr.bf16.mxu0 0
        %393 = vmatpush1.bf16.msra.mxu0 0
        %394 = vmatprep.subr.bf16.mxu0 0
        %395 = vmatpush1.bf16.msra.mxu0 0
        %396 = vmatprep.subr.bf16.mxu0 0
        %397 = vmatpush1.bf16.msra.mxu0 0
        %398 = vmatprep.subr.bf16.mxu0 0
        %399 = vmatpush1.bf16.msra.mxu0 0
        %400 = vmatprep.subr.bf16.mxu0 0
        %401 = vmatpush1.bf16.msra.mxu0 0
        %402 = vmatprep.subr.bf16.mxu0 0
        %403 = vmatpush1.bf16.msra.mxu0 0
        %404 = vmatprep.subr.bf16.mxu0 0
        %405 = vmatpush1.bf16.msra.mxu0 0
        %406 = vmatprep.subr.bf16.mxu0 0
        %407 = vmatpush1.bf16.msra.mxu0 0
        %408 = vmatprep.subr.bf16.mxu0 0
        %409 = vmatpush1.bf16.msra.mxu0 0
        %410 = vmatprep.mubr.bf16.mxu0 0
        %411 = vmatmul.mubr.bf16.gmra.mrb[0].mxu0 %v376
        %v412 = vpop.f32.mrb[0].mxu0
        %v413 = vadd.f32 0.0, %v412
        %v414 = vpop.f32.mrb[0].mxu0
        %v415 = vpop.f32.mrb[0].mxu0
        %v416 = vpop.f32.mrb[0].mxu0
        %417 = vdwg.mxu0
        %v418 = vadd.f32 %v360, %v413
        %s419 = scalar_lea.vmem %s286, 3 [#allocation9]
        %v420 = vld [vmem:[%s419] sm:$0x1]
        %v421 = vunpack.c.l.bf16 %v420
        %v422 = vpack.c.bf16 %v357, %v357
        %v427 = vunpack.c.l.b16 %v351
        %v428 = vunpack.c.l.b16 %v352
        %v429 = vunpack.c.l.b16 %v353
        %v430 = vunpack.c.l.b16 %v354
        %v431 = vpack.c.b16 %v428, %v427
        %v432 = vpack.c.b16 %v430, %v429
        %v436 = vsel %vm374, %v422, 0
        %438 = vmatprep.subr.bf16.mxu0 0
        %439 = vmatpush1.bf16.msra.mxu0 %v431
        %440 = vmatprep.subr.bf16.mxu0 0
        %441 = vmatpush1.bf16.msra.mxu0 %v432
        %442 = vmatprep.subr.bf16.mxu0 0
        %443 = vmatpush1.bf16.msra.mxu0 0
        %444 = vmatprep.subr.bf16.mxu0 0
        %445 = vmatpush1.bf16.msra.mxu0 0
        %446 = vmatprep.subr.bf16.mxu0 0
        %447 = vmatpush1.bf16.msra.mxu0 0
        %448 = vmatprep.subr.bf16.mxu0 0
        %449 = vmatpush1.bf16.msra.mxu0 0
        %450 = vmatprep.subr.bf16.mxu0 0
        %451 = vmatpush1.bf16.msra.mxu0 0
        %452 = vmatprep.subr.bf16.mxu0 0
        %453 = vmatpush1.bf16.msra.mxu0 0
        %454 = vmatprep.subr.bf16.mxu0 0
        %455 = vmatpush1.bf16.msra.mxu0 0
        %456 = vmatprep.subr.bf16.mxu0 0
        %457 = vmatpush1.bf16.msra.mxu0 0
        %458 = vmatprep.subr.bf16.mxu0 0
        %459 = vmatpush1.bf16.msra.mxu0 0
        %460 = vmatprep.subr.bf16.mxu0 0
        %461 = vmatpush1.bf16.msra.mxu0 0
        %462 = vmatprep.subr.bf16.mxu0 0
        %463 = vmatpush1.bf16.msra.mxu0 0
        %464 = vmatprep.subr.bf16.mxu0 0
        %465 = vmatpush1.bf16.msra.mxu0 0
        %466 = vmatprep.subr.bf16.mxu0 0
        %467 = vmatpush1.bf16.msra.mxu0 0
        %468 = vmatprep.subr.bf16.mxu0 0
        %469 = vmatpush1.bf16.msra.mxu0 0
        %470 = vmatprep.mubr.bf16.mxu0 0
        %471 = vmatmul.mubr.bf16.gmra.mrb[0].mxu0 %v436
        %v472 = vpop.f32.mrb[0].mxu0
        %v473 = vadd.f32 0.0, %v472
        %v474 = vpop.f32.mrb[0].mxu0
        %v475 = vpop.f32.mrb[0].mxu0
        %v476 = vpop.f32.mrb[0].mxu0
        %477 = vdwg.mxu0
        %v478 = vadd.f32 %v421, %v473
        %v479 = vxor.u32 %v418, 2147483648
        %v480 = vmul.f32 %v479, 1.442695
        %v481 = vpow.pop %v480
        %v482 = vadd.f32 %v481, 1.0
        %v483 = vrcp.pop %v482
        %v484 = vmul.f32 1.0, %v483
        %v485 = vtanh.pop %v418
        %v488 = vunpack.c.l.s4 1983009808
        %v489 = vunpack.c.0.s8 %v488
        %v490 = vlaneseq
        %v491 = vshrl.u32 %v490, 7
        %v492 = vsub.s32 %v489, %v491
        %v493 = vrot.slane %v356, %v492
        %494 = vrot.lane.b32.xlu0 %v493, 32
        %v495 = vpop.permute.xlu0 %494
        %v497 = vmul.f32 %v484, %v495
        %499 = vrot.lane.b32.xlu0 %v485, 64
        %v500 = vpop.permute.xlu0 %499
        %v502 = vmul.f32 %v484, %v500
        %504 = vrot.lane.b32.xlu0 %v502, 32
        %v505 = vpop.permute.xlu0 %504
        %v507 = vadd.f32 %v497, %v505
        %v508 = vtanh.pop %v507
        %510 = vrot.lane.b32.xlu0 %v508, 64
        %v511 = vpop.permute.xlu0 %510
        %v513 = vmul.f32 %v484, %v511
        %v514 = vxor.u32 %v478, 2147483648
        %v515 = vmul.f32 %v514, 1.442695
        %v516 = vpow.pop %v515
        %v517 = vadd.f32 %v516, 1.0
        %v518 = vrcp.pop %v517
        %v519 = vmul.f32 1.0, %v518
        %v520 = vtanh.pop %v478
        %v523 = vunpack.c.l.s4 1983009808
        %v524 = vunpack.c.0.s8 %v523
        %v525 = vlaneseq
        %v526 = vshrl.u32 %v525, 7
        %v527 = vsub.s32 %v524, %v526
        %v528 = vrot.slane %v358, %v527
        %529 = vrot.lane.b32.xlu0 %v528, 32
        %v530 = vpop.permute.xlu0 %529
        %v532 = vmul.f32 %v519, %v530
        %534 = vrot.lane.b32.xlu0 %v520, 64
        %v535 = vpop.permute.xlu0 %534
        %v537 = vmul.f32 %v519, %v535
        %539 = vrot.lane.b32.xlu0 %v537, 32
        %v540 = vpop.permute.xlu0 %539
        %v542 = vadd.f32 %v532, %v540
        %v543 = vtanh.pop %v542
        %545 = vrot.lane.b32.xlu0 %v543, 64
        %v546 = vpop.permute.xlu0 %545
        %v548 = vmul.f32 %v519, %v546
        %v549 = vpack.c.bf16 %v513, %v513
        %v552 = vunpack.c.l.s4 1966171168
        %v553 = vunpack.c.0.s8 %v552
        %v554 = vlaneseq
        %v555 = vshrl.u32 %v554, 7
        %v556 = vsub.s32 %v553, %v555
        %v557 = vrot.slane %v549, %v556
        %v559 = vunpack.c.l.s4 1966171168
        %v560 = vunpack.c.0.s8 %v559
        %v561 = vlaneseq
        %v562 = vshrl.u32 %v561, 7
        %v563 = vsub.s32 %v560, %v562
        %v564 = vrot.slane %v557, %v563
        %565 = vrot.lane.b32.xlu0 %v564, 32
        %v566 = vpop.permute.xlu0 %565
        %vm568 = vcmask 253952
        %569 = vst.msk [vmem:[%s323] sm:$0x1] %vm568, %v566
        %v570 = vpack.c.bf16 %v548, %v548
        %v573 = vunpack.c.l.s4 1966171168
        %v574 = vunpack.c.0.s8 %v573
        %v575 = vlaneseq
        %v576 = vshrl.u32 %v575, 7
        %v577 = vsub.s32 %v574, %v576
        %v578 = vrot.slane %v570, %v577
        %v580 = vunpack.c.l.s4 1966171168
        %v581 = vunpack.c.0.s8 %v580
        %v582 = vlaneseq
        %v583 = vshrl.u32 %v582, 7
        %v584 = vsub.s32 %v581, %v583
        %v585 = vrot.slane %v578, %v584
        %586 = vrot.lane.b32.xlu0 %v585, 32
        %v587 = vpop.permute.xlu0 %586
        %s589 = scalar_lea.vmem %s330, 3 [#allocation15]
        %590 = vst.msk [vmem:[%s589] sm:$0x1] %vm568, %v587
        %s591 = scalar_lea.vmem %s277, 1 [#allocation6]
        %v592 = vld [vmem:[%s591] sm:$0x1]
        %v593 = vunpack.c.l.bf16 %v592
        %594 = vrot.lane.b32.xlu0 %v549, 32
        %v595 = vpop.permute.xlu0 %594
        %v597 = vsel %vm374, %v595, 0
        %599 = vmatprep.subr.bf16.mxu0 0
        %600 = vmatpush1.bf16.msra.mxu0 %v370
        %601 = vmatprep.subr.bf16.mxu0 0
        %602 = vmatpush1.bf16.msra.mxu0 %v371
        %603 = vmatprep.subr.bf16.mxu0 0
        %604 = vmatpush1.bf16.msra.mxu0 0
        %605 = vmatprep.subr.bf16.mxu0 0
        %606 = vmatpush1.bf16.msra.mxu0 0
        %607 = vmatprep.subr.bf16.mxu0 0
        %608 = vmatpush1.bf16.msra.mxu0 0
        %609 = vmatprep.subr.bf16.mxu0 0
        %610 = vmatpush1.bf16.msra.mxu0 0
        %611 = vmatprep.subr.bf16.mxu0 0
        %612 = vmatpush1.bf16.msra.mxu0 0
        %613 = vmatprep.subr.bf16.mxu0 0
        %614 = vmatpush1.bf16.msra.mxu0 0
        %615 = vmatprep.subr.bf16.mxu0 0
        %616 = vmatpush1.bf16.msra.mxu0 0
        %617 = vmatprep.subr.bf16.mxu0 0
        %618 = vmatpush1.bf16.msra.mxu0 0
        %619 = vmatprep.subr.bf16.mxu0 0
        %620 = vmatpush1.bf16.msra.mxu0 0
        %621 = vmatprep.subr.bf16.mxu0 0
        %622 = vmatpush1.bf16.msra.mxu0 0
        %623 = vmatprep.subr.bf16.mxu0 0
        %624 = vmatpush1.bf16.msra.mxu0 0
        %625 = vmatprep.subr.bf16.mxu0 0
        %626 = vmatpush1.bf16.msra.mxu0 0
        %627 = vmatprep.subr.bf16.mxu0 0
        %628 = vmatpush1.bf16.msra.mxu0 0
        %629 = vmatprep.subr.bf16.mxu0 0
        %630 = vmatpush1.bf16.msra.mxu0 0
        %631 = vmatprep.mubr.bf16.mxu0 0
        %632 = vmatmul.mubr.bf16.gmra.mrb[0].mxu0 %v597
        %v633 = vpop.f32.mrb[0].mxu0
        %v634 = vadd.f32 0.0, %v633
        %v635 = vpop.f32.mrb[0].mxu0
        %v636 = vpop.f32.mrb[0].mxu0
        %v637 = vpop.f32.mrb[0].mxu0
        %638 = vdwg.mxu0
        %v639 = vadd.f32 %v593, %v634
        %s640 = scalar_lea.vmem %s286, 2 [#allocation9]
        %v641 = vld [vmem:[%s640] sm:$0x1]
        %v642 = vunpack.c.l.bf16 %v641
        %643 = vrot.lane.b32.xlu0 %v570, 32
        %v644 = vpop.permute.xlu0 %643
        %v646 = vsel %vm374, %v644, 0
        %648 = vmatprep.subr.bf16.mxu0 0
        %649 = vmatpush1.bf16.msra.mxu0 %v431
        %650 = vmatprep.subr.bf16.mxu0 0
        %651 = vmatpush1.bf16.msra.mxu0 %v432
        %652 = vmatprep.subr.bf16.mxu0 0
        %653 = vmatpush1.bf16.msra.mxu0 0
        %654 = vmatprep.subr.bf16.mxu0 0
        %655 = vmatpush1.bf16.msra.mxu0 0
        %656 = vmatprep.subr.bf16.mxu0 0
        %657 = vmatpush1.bf16.msra.mxu0 0
        %658 = vmatprep.subr.bf16.mxu0 0
        %659 = vmatpush1.bf16.msra.mxu0 0
        %660 = vmatprep.subr.bf16.mxu0 0
        %661 = vmatpush1.bf16.msra.mxu0 0
        %662 = vmatprep.subr.bf16.mxu0 0
        %663 = vmatpush1.bf16.msra.mxu0 0
        %664 = vmatprep.subr.bf16.mxu0 0
        %665 = vmatpush1.bf16.msra.mxu0 0
        %666 = vmatprep.subr.bf16.mxu0 0
        %667 = vmatpush1.bf16.msra.mxu0 0
        %668 = vmatprep.subr.bf16.mxu0 0
        %669 = vmatpush1.bf16.msra.mxu0 0
        %670 = vmatprep.subr.bf16.mxu0 0
        %671 = vmatpush1.bf16.msra.mxu0 0
        %672 = vmatprep.subr.bf16.mxu0 0
        %673 = vmatpush1.bf16.msra.mxu0 0
        %674 = vmatprep.subr.bf16.mxu0 0
        %675 = vmatpush1.bf16.msra.mxu0 0
        %676 = vmatprep.subr.bf16.mxu0 0
        %677 = vmatpush1.bf16.msra.mxu0 0
        %678 = vmatprep.subr.bf16.mxu0 0
        %679 = vmatpush1.bf16.msra.mxu0 0
        %680 = vmatprep.mubr.bf16.mxu0 0
        %681 = vmatmul.mubr.bf16.gmra.mrb[0].mxu0 %v646
        %v682 = vpop.f32.mrb[0].mxu0
        %v683 = vadd.f32 0.0, %v682
        %v684 = vpop.f32.mrb[0].mxu0
        %v685 = vpop.f32.mrb[0].mxu0
        %v686 = vpop.f32.mrb[0].mxu0
        %687 = vdwg.mxu0
        %v688 = vadd.f32 %v642, %v683
        %v689 = vxor.u32 %v639, 2147483648
        %v690 = vmul.f32 %v689, 1.442695
        %v691 = vpow.pop %v690
        %v692 = vadd.f32 %v691, 1.0
        %v693 = vrcp.pop %v692
        %v694 = vmul.f32 1.0, %v693
        %v695 = vtanh.pop %v639
        %v696 = vmul.f32 %v694, %v507
        %698 = vrot.lane.b32.xlu0 %v695, 64
        %v699 = vpop.permute.xlu0 %698
        %v701 = vmul.f32 %v694, %v699
        %703 = vrot.lane.b32.xlu0 %v701, 32
        %v704 = vpop.permute.xlu0 %703
        %v706 = vadd.f32 %v696, %v704
        %v707 = vtanh.pop %v706
        %709 = vrot.lane.b32.xlu0 %v707, 64
        %v710 = vpop.permute.xlu0 %709
        %v712 = vmul.f32 %v694, %v710
        %v713 = vxor.u32 %v688, 2147483648
        %v714 = vmul.f32 %v713, 1.442695
        %v715 = vpow.pop %v714
        %v716 = vadd.f32 %v715, 1.0
        %v717 = vrcp.pop %v716
        %v718 = vmul.f32 1.0, %v717
        %v719 = vtanh.pop %v688
        %v720 = vmul.f32 %v718, %v542
        %722 = vrot.lane.b32.xlu0 %v719, 64
        %v723 = vpop.permute.xlu0 %722
        %v725 = vmul.f32 %v718, %v723
        %727 = vrot.lane.b32.xlu0 %v725, 32
        %v728 = vpop.permute.xlu0 %727
        %v730 = vadd.f32 %v720, %v728
        %v731 = vtanh.pop %v730
        %733 = vrot.lane.b32.xlu0 %v731, 64
        %v734 = vpop.permute.xlu0 %733
        %v736 = vmul.f32 %v718, %v734
        %v737 = vpack.c.bf16 %v712, %v712
        %v740 = vunpack.c.l.s4 1966171168
        %v741 = vunpack.c.0.s8 %v740
        %v742 = vlaneseq
        %v743 = vshrl.u32 %v742, 7
        %v744 = vsub.s32 %v741, %v743
        %v745 = vrot.slane %v737, %v744
        %v747 = vunpack.c.l.s4 1966171168
        %v748 = vunpack.c.0.s8 %v747
        %v749 = vlaneseq
        %v750 = vshrl.u32 %v749, 7
        %v751 = vsub.s32 %v748, %v750
        %v752 = vrot.slane %v745, %v751
        %753 = vrot.lane.b32.xlu0 %v752, 32
        %v754 = vpop.permute.xlu0 %753
        %s756 = scalar_lea.vmem %s323, 1 [#allocation14]
        %757 = vst.msk [vmem:[%s756] sm:$0x1] %vm568, %v754
        %v758 = vpack.c.bf16 %v736, %v736
        %v761 = vunpack.c.l.s4 1966171168
        %v762 = vunpack.c.0.s8 %v761
        %v763 = vlaneseq
        %v764 = vshrl.u32 %v763, 7
        %v765 = vsub.s32 %v762, %v764
        %v766 = vrot.slane %v758, %v765
        %v768 = vunpack.c.l.s4 1966171168
        %v769 = vunpack.c.0.s8 %v768
        %v770 = vlaneseq
        %v771 = vshrl.u32 %v770, 7
        %v772 = vsub.s32 %v769, %v771
        %v773 = vrot.slane %v766, %v772
        %774 = vrot.lane.b32.xlu0 %v773, 32
        %v775 = vpop.permute.xlu0 %774
        %s777 = scalar_lea.vmem %s330, 2 [#allocation15]
        %778 = vst.msk [vmem:[%s777] sm:$0x1] %vm568, %v775
        %s779 = scalar_lea.vmem %s277, 2 [#allocation6]
        %v780 = vld [vmem:[%s779] sm:$0x1]
        %v781 = vunpack.c.l.bf16 %v780
        %782 = vrot.lane.b32.xlu0 %v737, 32
        %v783 = vpop.permute.xlu0 %782
        %v785 = vsel %vm374, %v783, 0
        %787 = vmatprep.subr.bf16.mxu0 0
        %788 = vmatpush1.bf16.msra.mxu0 %v370
        %789 = vmatprep.subr.bf16.mxu0 0
        %790 = vmatpush1.bf16.msra.mxu0 %v371
        %791 = vmatprep.subr.bf16.mxu0 0
        %792 = vmatpush1.bf16.msra.mxu0 0
        %793 = vmatprep.subr.bf16.mxu0 0
        %794 = vmatpush1.bf16.msra.mxu0 0
        %795 = vmatprep.subr.bf16.mxu0 0
        %796 = vmatpush1.bf16.msra.mxu0 0
        %797 = vmatprep.subr.bf16.mxu0 0
        %798 = vmatpush1.bf16.msra.mxu0 0
        %799 = vmatprep.subr.bf16.mxu0 0
        %800 = vmatpush1.bf16.msra.mxu0 0
        %801 = vmatprep.subr.bf16.mxu0 0
        %802 = vmatpush1.bf16.msra.mxu0 0
        %803 = vmatprep.subr.bf16.mxu0 0
        %804 = vmatpush1.bf16.msra.mxu0 0
        %805 = vmatprep.subr.bf16.mxu0 0
        %806 = vmatpush1.bf16.msra.mxu0 0
        %807 = vmatprep.subr.bf16.mxu0 0
        %808 = vmatpush1.bf16.msra.mxu0 0
        %809 = vmatprep.subr.bf16.mxu0 0
        %810 = vmatpush1.bf16.msra.mxu0 0
        %811 = vmatprep.subr.bf16.mxu0 0
        %812 = vmatpush1.bf16.msra.mxu0 0
        %813 = vmatprep.subr.bf16.mxu0 0
        %814 = vmatpush1.bf16.msra.mxu0 0
        %815 = vmatprep.subr.bf16.mxu0 0
        %816 = vmatpush1.bf16.msra.mxu0 0
        %817 = vmatprep.subr.bf16.mxu0 0
        %818 = vmatpush1.bf16.msra.mxu0 0
        %819 = vmatprep.mubr.bf16.mxu0 0
        %820 = vmatmul.mubr.bf16.gmra.mrb[0].mxu0 %v785
        %v821 = vpop.f32.mrb[0].mxu0
        %v822 = vadd.f32 0.0, %v821
        %v823 = vpop.f32.mrb[0].mxu0
        %v824 = vpop.f32.mrb[0].mxu0
        %v825 = vpop.f32.mrb[0].mxu0
        %826 = vdwg.mxu0
        %v827 = vadd.f32 %v781, %v822
        %s828 = scalar_lea.vmem %s286, 1 [#allocation9]
        %v829 = vld [vmem:[%s828] sm:$0x1]
        %v830 = vunpack.c.l.bf16 %v829
        %831 = vrot.lane.b32.xlu0 %v758, 32
        %v832 = vpop.permute.xlu0 %831
        %v834 = vsel %vm374, %v832, 0
        %836 = vmatprep.subr.bf16.mxu0 0
        %837 = vmatpush1.bf16.msra.mxu0 %v431
        %838 = vmatprep.subr.bf16.mxu0 0
        %839 = vmatpush1.bf16.msra.mxu0 %v432
        %840 = vmatprep.subr.bf16.mxu0 0
        %841 = vmatpush1.bf16.msra.mxu0 0
        %842 = vmatprep.subr.bf16.mxu0 0
        %843 = vmatpush1.bf16.msra.mxu0 0
        %844 = vmatprep.subr.bf16.mxu0 0
        %845 = vmatpush1.bf16.msra.mxu0 0
        %846 = vmatprep.subr.bf16.mxu0 0
        %847 = vmatpush1.bf16.msra.mxu0 0
        %848 = vmatprep.subr.bf16.mxu0 0
        %849 = vmatpush1.bf16.msra.mxu0 0
        %850 = vmatprep.subr.bf16.mxu0 0
        %851 = vmatpush1.bf16.msra.mxu0 0
        %852 = vmatprep.subr.bf16.mxu0 0
        %853 = vmatpush1.bf16.msra.mxu0 0
        %854 = vmatprep.subr.bf16.mxu0 0
        %855 = vmatpush1.bf16.msra.mxu0 0
        %856 = vmatprep.subr.bf16.mxu0 0
        %857 = vmatpush1.bf16.msra.mxu0 0
        %858 = vmatprep.subr.bf16.mxu0 0
        %859 = vmatpush1.bf16.msra.mxu0 0
        %860 = vmatprep.subr.bf16.mxu0 0
        %861 = vmatpush1.bf16.msra.mxu0 0
        %862 = vmatprep.subr.bf16.mxu0 0
        %863 = vmatpush1.bf16.msra.mxu0 0
        %864 = vmatprep.subr.bf16.mxu0 0
        %865 = vmatpush1.bf16.msra.mxu0 0
        %866 = vmatprep.subr.bf16.mxu0 0
        %867 = vmatpush1.bf16.msra.mxu0 0
        %868 = vmatprep.mubr.bf16.mxu0 0
        %869 = vmatmul.mubr.bf16.gmra.mrb[0].mxu0 %v834
        %v870 = vpop.f32.mrb[0].mxu0
        %v871 = vadd.f32 0.0, %v870
        %v872 = vpop.f32.mrb[0].mxu0
        %v873 = vpop.f32.mrb[0].mxu0
        %v874 = vpop.f32.mrb[0].mxu0
        %875 = vdwg.mxu0
        %v876 = vadd.f32 %v830, %v871
        %v877 = vxor.u32 %v827, 2147483648
        %v878 = vmul.f32 %v877, 1.442695
        %v879 = vpow.pop %v878
        %v880 = vadd.f32 %v879, 1.0
        %v881 = vrcp.pop %v880
        %v882 = vmul.f32 1.0, %v881
        %v883 = vtanh.pop %v827
        %v884 = vmul.f32 %v882, %v706
        %886 = vrot.lane.b32.xlu0 %v883, 64
        %v887 = vpop.permute.xlu0 %886
        %v889 = vmul.f32 %v882, %v887
        %891 = vrot.lane.b32.xlu0 %v889, 32
        %v892 = vpop.permute.xlu0 %891
        %v894 = vadd.f32 %v884, %v892
        %v895 = vtanh.pop %v894
        %897 = vrot.lane.b32.xlu0 %v895, 64
        %v898 = vpop.permute.xlu0 %897
        %v900 = vmul.f32 %v882, %v898
        %v901 = vxor.u32 %v876, 2147483648
        %v902 = vmul.f32 %v901, 1.442695
        %v903 = vpow.pop %v902
        %v904 = vadd.f32 %v903, 1.0
        %v905 = vrcp.pop %v904
        %v906 = vmul.f32 1.0, %v905
        %v907 = vtanh.pop %v876
        %v908 = vmul.f32 %v906, %v730
        %910 = vrot.lane.b32.xlu0 %v907, 64
        %v911 = vpop.permute.xlu0 %910
        %v913 = vmul.f32 %v906, %v911
        %915 = vrot.lane.b32.xlu0 %v913, 32
        %v916 = vpop.permute.xlu0 %915
        %v918 = vadd.f32 %v908, %v916
        %v919 = vtanh.pop %v918
        %921 = vrot.lane.b32.xlu0 %v919, 64
        %v922 = vpop.permute.xlu0 %921
        %v924 = vmul.f32 %v906, %v922
        %v925 = vpack.c.bf16 %v900, %v900
        %v928 = vunpack.c.l.s4 1966171168
        %v929 = vunpack.c.0.s8 %v928
        %v930 = vlaneseq
        %v931 = vshrl.u32 %v930, 7
        %v932 = vsub.s32 %v929, %v931
        %v933 = vrot.slane %v925, %v932
        %v935 = vunpack.c.l.s4 1966171168
        %v936 = vunpack.c.0.s8 %v935
        %v937 = vlaneseq
        %v938 = vshrl.u32 %v937, 7
        %v939 = vsub.s32 %v936, %v938
        %v940 = vrot.slane %v933, %v939
        %941 = vrot.lane.b32.xlu0 %v940, 32
        %v942 = vpop.permute.xlu0 %941
        %s944 = scalar_lea.vmem %s323, 2 [#allocation14]
        %945 = vst.msk [vmem:[%s944] sm:$0x1] %vm568, %v942
        %v946 = vpack.c.bf16 %v924, %v924
        %v949 = vunpack.c.l.s4 1966171168
        %v950 = vunpack.c.0.s8 %v949
        %v951 = vlaneseq
        %v952 = vshrl.u32 %v951, 7
        %v953 = vsub.s32 %v950, %v952
        %v954 = vrot.slane %v946, %v953
        %v956 = vunpack.c.l.s4 1966171168
        %v957 = vunpack.c.0.s8 %v956
        %v958 = vlaneseq
        %v959 = vshrl.u32 %v958, 7
        %v960 = vsub.s32 %v957, %v959
        %v961 = vrot.slane %v954, %v960
        %962 = vrot.lane.b32.xlu0 %v961, 32
        %v963 = vpop.permute.xlu0 %962
        %s965 = scalar_lea.vmem %s330, 1 [#allocation15]
        %966 = vst.msk [vmem:[%s965] sm:$0x1] %vm568, %v963
        %s967 = scalar_lea.vmem %s277, 3 [#allocation6]
        %v968 = vld [vmem:[%s967] sm:$0x1]
        %v969 = vunpack.c.l.bf16 %v968
        %970 = vrot.lane.b32.xlu0 %v925, 32
        %v971 = vpop.permute.xlu0 %970
        %v973 = vsel %vm374, %v971, 0
        %975 = vmatprep.subr.bf16.mxu0 0
        %976 = vmatpush1.bf16.msra.mxu0 %v370
        %977 = vmatprep.subr.bf16.mxu0 0
        %978 = vmatpush1.bf16.msra.mxu0 %v371
        %979 = vmatprep.subr.bf16.mxu0 0
        %980 = vmatpush1.bf16.msra.mxu0 0
        %981 = vmatprep.subr.bf16.mxu0 0
        %982 = vmatpush1.bf16.msra.mxu0 0
        %983 = vmatprep.subr.bf16.mxu0 0
        %984 = vmatpush1.bf16.msra.mxu0 0
        %985 = vmatprep.subr.bf16.mxu0 0
        %986 = vmatpush1.bf16.msra.mxu0 0
        %987 = vmatprep.subr.bf16.mxu0 0
        %988 = vmatpush1.bf16.msra.mxu0 0
        %989 = vmatprep.subr.bf16.mxu0 0
        %990 = vmatpush1.bf16.msra.mxu0 0
        %991 = vmatprep.subr.bf16.mxu0 0
        %992 = vmatpush1.bf16.msra.mxu0 0
        %993 = vmatprep.subr.bf16.mxu0 0
        %994 = vmatpush1.bf16.msra.mxu0 0
        %995 = vmatprep.subr.bf16.mxu0 0
        %996 = vmatpush1.bf16.msra.mxu0 0
        %997 = vmatprep.subr.bf16.mxu0 0
        %998 = vmatpush1.bf16.msra.mxu0 0
        %999 = vmatprep.subr.bf16.mxu0 0
        %1000 = vmatpush1.bf16.msra.mxu0 0
        %1001 = vmatprep.subr.bf16.mxu0 0
        %1002 = vmatpush1.bf16.msra.mxu0 0
        %1003 = vmatprep.subr.bf16.mxu0 0
        %1004 = vmatpush1.bf16.msra.mxu0 0
        %1005 = vmatprep.subr.bf16.mxu0 0
        %1006 = vmatpush1.bf16.msra.mxu0 0
        %1007 = vmatprep.mubr.bf16.mxu0 0
        %1008 = vmatmul.mubr.bf16.gmra.mrb[0].mxu0 %v973
        %v1009 = vpop.f32.mrb[0].mxu0
        %v1010 = vadd.f32 0.0, %v1009
        %v1011 = vpop.f32.mrb[0].mxu0
        %v1012 = vpop.f32.mrb[0].mxu0
        %v1013 = vpop.f32.mrb[0].mxu0
        %1014 = vdwg.mxu0
        %v1015 = vadd.f32 %v969, %v1010
        %v1016 = vld [vmem:[%s286] sm:$0x1]
        %v1017 = vunpack.c.l.bf16 %v1016
        %1018 = vrot.lane.b32.xlu0 %v946, 32
        %v1019 = vpop.permute.xlu0 %1018
        %v1021 = vsel %vm374, %v1019, 0
        %1023 = vmatprep.subr.bf16.mxu0 0
        %1024 = vmatpush1.bf16.msra.mxu0 %v431
        %1025 = vmatprep.subr.bf16.mxu0 0
        %1026 = vmatpush1.bf16.msra.mxu0 %v432
        %1027 = vmatprep.subr.bf16.mxu0 0
        %1028 = vmatpush1.bf16.msra.mxu0 0
        %1029 = vmatprep.subr.bf16.mxu0 0
        %1030 = vmatpush1.bf16.msra.mxu0 0
        %1031 = vmatprep.subr.bf16.mxu0 0
        %1032 = vmatpush1.bf16.msra.mxu0 0
        %1033 = vmatprep.subr.bf16.mxu0 0
        %1034 = vmatpush1.bf16.msra.mxu0 0
        %1035 = vmatprep.subr.bf16.mxu0 0
        %1036 = vmatpush1.bf16.msra.mxu0 0
        %1037 = vmatprep.subr.bf16.mxu0 0
        %1038 = vmatpush1.bf16.msra.mxu0 0
        %1039 = vmatprep.subr.bf16.mxu0 0
        %1040 = vmatpush1.bf16.msra.mxu0 0
        %1041 = vmatprep.subr.bf16.mxu0 0
        %1042 = vmatpush1.bf16.msra.mxu0 0
        %1043 = vmatprep.subr.bf16.mxu0 0
        %1044 = vmatpush1.bf16.msra.mxu0 0
        %1045 = vmatprep.subr.bf16.mxu0 0
        %1046 = vmatpush1.bf16.msra.mxu0 0
        %1047 = vmatprep.subr.bf16.mxu0 0
        %1048 = vmatpush1.bf16.msra.mxu0 0
        %1049 = vmatprep.subr.bf16.mxu0 0
        %1050 = vmatpush1.bf16.msra.mxu0 0
        %1051 = vmatprep.subr.bf16.mxu0 0
        %1052 = vmatpush1.bf16.msra.mxu0 0
        %1053 = vmatprep.subr.bf16.mxu0 0
        %1054 = vmatpush1.bf16.msra.mxu0 0
        %1055 = vmatprep.mubr.bf16.mxu0 0
        %1056 = vmatmul.mubr.bf16.gmra.mrb[0].mxu0 %v1021
        %v1057 = vpop.f32.mrb[0].mxu0
        %v1058 = vadd.f32 0.0, %v1057
        %v1059 = vpop.f32.mrb[0].mxu0
        %v1060 = vpop.f32.mrb[0].mxu0
        %v1061 = vpop.f32.mrb[0].mxu0
        %1062 = vdwg.mxu0
        %v1063 = vadd.f32 %v1017, %v1058
        %v1064 = vxor.u32 %v1015, 2147483648
        %v1065 = vmul.f32 %v1064, 1.442695
        %v1066 = vpow.pop %v1065
        %v1067 = vadd.f32 %v1066, 1.0
        %v1068 = vrcp.pop %v1067
        %v1069 = vmul.f32 1.0, %v1068
        %v1070 = vtanh.pop %v1015
        %v1071 = vmul.f32 %v1069, %v894
        %1073 = vrot.lane.b32.xlu0 %v1070, 64
        %v1074 = vpop.permute.xlu0 %1073
        %v1076 = vmul.f32 %v1069, %v1074
        %1078 = vrot.lane.b32.xlu0 %v1076, 32
        %v1079 = vpop.permute.xlu0 %1078
        %v1081 = vadd.f32 %v1071, %v1079
        %v1082 = vtanh.pop %v1081
        %1084 = vrot.lane.b32.xlu0 %v1082, 64
        %v1085 = vpop.permute.xlu0 %1084
        %v1087 = vmul.f32 %v1069, %v1085
        %v1088 = vxor.u32 %v1063, 2147483648
        %v1089 = vmul.f32 %v1088, 1.442695
        %v1090 = vpow.pop %v1089
        %v1091 = vadd.f32 %v1090, 1.0
        %v1092 = vrcp.pop %v1091
        %v1093 = vmul.f32 1.0, %v1092
        %v1094 = vtanh.pop %v1063
        %v1095 = vmul.f32 %v1093, %v918
        %1097 = vrot.lane.b32.xlu0 %v1094, 64
        %v1098 = vpop.permute.xlu0 %1097
        %v1100 = vmul.f32 %v1093, %v1098
        %1102 = vrot.lane.b32.xlu0 %v1100, 32
        %v1103 = vpop.permute.xlu0 %1102
        %v1105 = vadd.f32 %v1095, %v1103
        %v1106 = vtanh.pop %v1105
        %1108 = vrot.lane.b32.xlu0 %v1106, 64
        %v1109 = vpop.permute.xlu0 %1108
        %v1111 = vmul.f32 %v1093, %v1109
        %v1112 = vpack.c.bf16 %v1087, %v1087
        %v1115 = vunpack.c.l.s4 1966171168
        %v1116 = vunpack.c.0.s8 %v1115
        %v1117 = vlaneseq
        %v1118 = vshrl.u32 %v1117, 7
        %v1119 = vsub.s32 %v1116, %v1118
        %v1120 = vrot.slane %v1112, %v1119
        %v1122 = vunpack.c.l.s4 1966171168
        %v1123 = vunpack.c.0.s8 %v1122
        %v1124 = vlaneseq
        %v1125 = vshrl.u32 %v1124, 7
        %v1126 = vsub.s32 %v1123, %v1125
        %v1127 = vrot.slane %v1120, %v1126
        %1128 = vrot.lane.b32.xlu0 %v1127, 32
        %v1129 = vpop.permute.xlu0 %1128
        %s1131 = scalar_lea.vmem %s323, 3 [#allocation14]
        %1132 = vst.msk [vmem:[%s1131] sm:$0x1] %vm568, %v1129
        %v1133 = vpack.c.bf16 %v1111, %v1111
        %v1136 = vunpack.c.l.s4 1966171168
        %v1137 = vunpack.c.0.s8 %v1136
        %v1138 = vlaneseq
        %v1139 = vshrl.u32 %v1138, 7
        %v1140 = vsub.s32 %v1137, %v1139
        %v1141 = vrot.slane %v1133, %v1140
        %v1143 = vunpack.c.l.s4 1966171168
        %v1144 = vunpack.c.0.s8 %v1143
        %v1145 = vlaneseq
        %v1146 = vshrl.u32 %v1145, 7
        %v1147 = vsub.s32 %v1144, %v1146
        %v1148 = vrot.slane %v1141, %v1147
        %1149 = vrot.lane.b32.xlu0 %v1148, 32
        %v1150 = vpop.permute.xlu0 %1149
        %1152 = vst.msk [vmem:[%s330] sm:$0x1] %vm568, %v1150
        %v1155 = vunpack.c.l.s4 1983009808
        %v1156 = vunpack.c.0.s8 %v1155
        %v1157 = vlaneseq
        %v1158 = vshrl.u32 %v1157, 7
        %v1159 = vsub.s32 %v1156, %v1158
        %v1160 = vrot.slane %v1087, %v1159
        %1161 = vrot.lane.b32.xlu0 %v1160, 32
        %v1162 = vpop.permute.xlu0 %1161
        %vm1164 = vcmask 254976
        %1165 = vst.msk [vmem:[#allocation2] sm:$0x3] %vm1164, %v1162
        %v1168 = vunpack.c.l.s4 1983009808
        %v1169 = vunpack.c.0.s8 %v1168
        %v1170 = vlaneseq
        %v1171 = vshrl.u32 %v1170, 7
        %v1172 = vsub.s32 %v1169, %v1171
        %v1173 = vrot.slane %v1081, %v1172
        %1174 = vrot.lane.b32.xlu0 %v1173, 96
        %v1175 = vpop.permute.xlu0 %1174
        %1177 = vst.msk [vmem:[#allocation3] sm:$0x3] %vm1164, %v1175
        %v1180 = vunpack.c.l.s4 1983009808
        %v1181 = vunpack.c.0.s8 %v1180
        %v1182 = vlaneseq
        %v1183 = vshrl.u32 %v1182, 7
        %v1184 = vsub.s32 %v1181, %v1183
        %v1185 = vrot.slane %v1111, %v1184
        %1186 = vrot.lane.b32.xlu0 %v1185, 32
        %v1187 = vpop.permute.xlu0 %1186
        %1189 = vst.msk [vmem:[#allocation4] sm:$0x3] %vm1164, %v1187
        %v1192 = vunpack.c.l.s4 1983009808
        %v1193 = vunpack.c.0.s8 %v1192
        %v1194 = vlaneseq
        %v1195 = vshrl.u32 %v1194, 7
        %v1196 = vsub.s32 %v1193, %v1195
        %v1197 = vrot.slane %v1105, %v1196
        %1198 = vrot.lane.b32.xlu0 %v1197, 96
        %v1199 = vpop.permute.xlu0 %1198
        %1201 = vst.msk [vmem:[#allocation5] sm:$0x3] %vm1164, %v1199
        %s1202 = sand.u32 %s134, 1
        %s1203 = scalar_lea.sflag [#allocation8], %s1202
        %s1204 = sand.u32 %s134, 1
        %s1205 = smul.addr %s1204, 4
        %s1206 = scalar_lea.vmem [#allocation14], %s1205
        %s1207 = sand.u32 %s162, 1
        %s1208 = scalar_lea.sflag [#allocation16], %s1207
        %s1209 = sand.u32 %s162, 1
        %s1210 = smul.addr %s1209, 4
        %s1211 = scalar_lea.vmem [#allocation15], %s1210
        // Predicated region
        $region57: #{tpu_custom_call.1} parent=35 // pred_check
          %p1212 = pneg %p144
        $region58: #{tpu_custom_call.1} parent=35 // pred_check_branch
          %1214 = sbr.rel (%p1212) target = $region60
        $region59: #{tpu_custom_call.1} parent=35 // pred_region
          %s1215 = smul.u32 4, %s30
          %s1217 = ssub.s32 64, 64
          %1218 = vsyncadd %s1203, %s1217
          %s1219 = smul.addr %s1215, 16
          %s1220 = scalar_lea.hbm %s4, %s1219
          %s1221 = sshll.u32 %s1206, 4
          %s1222 = int_to_ptr.vmem [resolvable:$true] %s1221
          %1227 = dma.vmem_to_hbm [thread:$0]  %s1222, 64, %s1220, %s1203, 16, 16, 1
        $region60: #{tpu_custom_call.1} parent=35 // pred_fallthru
          _
        // Predicated region
        $region61: #{tpu_custom_call.1} parent=35 // pred_check
          %p1228 = pneg %p172
        $region62: #{tpu_custom_call.1} parent=35 // pred_check_branch
          %1230 = sbr.rel (%p1228) target = $region64
        $region63: #{tpu_custom_call.1} parent=35 // pred_region
          %s1231 = ssub.s32 1, %s30
          %s1232 = smul.u32 4, %s1231
          %s1234 = ssub.s32 64, 64
          %1235 = vsyncadd %s1208, %s1234
          %s1236 = smul.addr %s1232, 16
          %s1237 = scalar_lea.hbm %s5, %s1236
          %s1238 = sshll.u32 %s1211, 4
          %s1239 = int_to_ptr.vmem [resolvable:$true] %s1238
          %1244 = dma.vmem_to_hbm [thread:$0]  %s1239, 64, %s1237, %s1208, 16, 16, 1
        $region64: #{tpu_custom_call.1} parent=35 // pred_fallthru
          _
      $region36: #{tpu_custom_call.1} parent=5 // pred_fallthru
        _
      %p1245 = scmp.le.s32.totalorder 2, %s25
      // Predicated region
      $region65: #{tpu_custom_call.1} parent=5 // pred_check
        %p1246 = pneg %p1245
      $region66: #{tpu_custom_call.1} parent=5 // pred_check_branch
        %1248 = sbr.rel (%p1246) target = $region68
      $region67: #{tpu_custom_call.1} parent=5 // pred_region
        %s1249 = ssub.s32 %s25, 2
        // Predicated region
        $region69: #{tpu_custom_call.1} parent=67 // pred_check
          %p1250 = pneg %p150
        $region70: #{tpu_custom_call.1} parent=67 // pred_check_branch
          %1252 = sbr.rel (%p1250) target = $region72
        $region71: #{tpu_custom_call.1} parent=67 // pred_region
          %s1253 = sand.u32 %s135, 1
          %s1254 = scalar_lea.sflag [#allocation8], %s1253
          %s1255 = sand.u32 %s135, 1
          %s1256 = smul.addr %s1255, 4
          %s1257 = scalar_lea.vmem [#allocation14], %s1256
          %1258 = dma.done %s1254, 64
        $region72: #{tpu_custom_call.1} parent=67 // pred_fallthru
          _
        // Predicated region
        $region73: #{tpu_custom_call.1} parent=67 // pred_check
          %p1259 = pneg %p178
        $region74: #{tpu_custom_call.1} parent=67 // pred_check_branch
          %1261 = sbr.rel (%p1259) target = $region76
        $region75: #{tpu_custom_call.1} parent=67 // pred_region
          %s1262 = sand.u32 %s163, 1
          %s1263 = scalar_lea.sflag [#allocation16], %s1262
          %s1264 = sand.u32 %s163, 1
          %s1265 = smul.addr %s1264, 4
          %s1266 = scalar_lea.vmem [#allocation15], %s1265
          %1267 = dma.done %s1263, 64
        $region76: #{tpu_custom_call.1} parent=67 // pred_fallthru
          _
      $region68: #{tpu_custom_call.1} parent=5 // pred_fallthru
        _
    $region6: #{tpu_custom_call.1} parent=1 // loop_footer
      %s29 = sadd.s32 1, %s25
    $region7: #{tpu_custom_call.1} parent=1 // loop_footer_branch
      %24 = sbr.rel target = $region3
    $region8: #{tpu_custom_call.1} parent=1 // loop_exit
      _
    %1268 = vsyncpa [#allocation7], 1
    %s1269 = scalar_lea.sflag [#allocation7], 1
    %1270 = vsyncpa %s1269, 1
    %1271 = vsyncpa [#allocation10], 1
    %s1272 = scalar_lea.sflag [#allocation10], 1
    %1273 = vsyncpa %s1272, 1
    %1274 = vsyncpa [#allocation13], 1
    %1275 = vsyncpa [#allocation8], 1
    %s1276 = scalar_lea.sflag [#allocation8], 1
    %1277 = vsyncpa %s1276, 1
    %1278 = vsyncpa [#allocation16], 1
    %s1279 = scalar_lea.sflag [#allocation16], 1
    %1280 = vsyncpa %s1279, 1

</llo_original>
